<compile_context>
chip_gen: v7x
topology: tpu7x:2x2x1
jax: 0.10.0
libtpu: 0.0.40
codegen_flags: <defaults>
</compile_context>

<pallas_src>
import functools
import math

import jax
import jax.numpy as jnp
from jax.experimental import pallas as pl
from jax.experimental.pallas import tpu as pltpu

# Small, runnable sizes (module's originals: WIDTH = HEIGHT = 500, N_POINTS = 200000).
WIDTH = 32
HEIGHT = 32
N_POINTS = 256

GAMMA = 1.0           # self.gamma in the module
MAX_DEPTH = 45.0      # passed to renderer.forward

# Tiling.  At full scale (H=W=500, N=200k):
#   * pick TILE_H in {10, 25} so n_tiles (50 / 20) is EVEN -> balanced split of
#     the "parallel" row-tile axis across the two v7x TensorCores;
#     width pads to 512 lanes -> P = TILE_H * 512.
#   * POINT_CHUNK ~ 512 on v7x (keeps the live (TK, P) f32 ramp/cov temporaries
#     ~2 x 10 MiB inside the 64 MiB VMEM); 1024-2048 on v5e/v6e (128 MiB VMEM).
#   Each doubling of POINT_CHUNK halves the number of ~0.35 us grid steps.
TILE_H = 8
POINT_CHUNK = 128

COV_SHARPNESS = 4.0   # smooth disc edge sharpness
R_MIN_PX = 0.5        # clamp projected radius: bounds k so the expanded
                      # quadratic stays well-conditioned in f32
BG_WEIGHT = 1.0       # background blend weight (exp((1-1)/gamma))


def _vmem_limit_bytes():
    """~75% of per-core VMEM: ~96 MiB on v5e/v6e (128 MiB), ~48 MiB on v7x (64 MiB)."""
    try:
        cap = int(pltpu.get_tpu_info().vmem_capacity_bytes)
    except Exception:
        cap = 64 * 1024 * 1024
    return min(max(32 * 1024 * 1024, (cap * 3) // 4), 100 * 1024 * 1024)


def _splat_kernel(geo_ref, pay_ref, basis_ref, out_ref, acc_ref, *,
                  max_depth, bg_weight):
    """One (row-tile, point-chunk) step of the sphere splat / blend.

    Per (point, pixel) element: two MXU matmuls + one VPU clamp, all f32
    (no bf16 round trips -- the MXU is <6% utilized so f32 passes are hidden).
    """
    k = pl.program_id(1)                 # point chunk (reduction axis, last)
    nk = pl.num_programs(1)

    @pl.when(k == 0)
    def _():
        acc_ref[...] = jnp.zeros(acc_ref.shape, acc_ref.dtype)

    # MXU #1: expanded-quadratic distance ramp for every (point, pixel) pair.
    ramp = jnp.dot(geo_ref[...], basis_ref[...],
                   preferred_element_type=jnp.float32)            # (TK, P)
    cov = jnp.clip(ramp, 0.0, 1.0)                                # only VPU pass

    # MXU #2: fold [w*r, w*g, w*b, w, w*d, 0..] sums into the resident f32 acc.
    acc_ref[...] += jnp.dot(pay_ref[...], cov,
                            preferred_element_type=jnp.float32)   # (8, P)

    @pl.when(k == nk - 1)
    def _():
        wsum = acc_ref[3:4, :]                                    # (1, P)
        inv = pl.reciprocal(wsum + bg_weight, approx=True)
        out_ref[0:3, :] = acc_ref[0:3, :] * inv                   # blended rgb
        out_ref[3:4, :] = wsum                                    # total weight
        # Weighted-mean depth; background sits at normalized depth 1.0, so
        # un-hit pixels report max_depth (same convention as before).
        out_ref[4:5, :] = (acc_ref[4:5, :] + bg_weight) * inv * max_depth


def _render_pallas(geo, payload, basis, n_tiles, pixels_per_tile, max_depth):
    npad = geo.shape[0]
    assert npad % POINT_CHUNK == 0
    nk = npad // POINT_CHUNK
    p = pixels_per_tile                  # TILE_H * width_pad (multiple of 128)

    kernel = functools.partial(_splat_kernel, max_depth=max_depth,
                               bg_weight=BG_WEIGHT)
    return pl.pallas_call(
        kernel,
        out_shape=jax.ShapeDtypeStruct((5, n_tiles * p), jnp.float32),
        grid_spec=pltpu.PrefetchScalarGridSpec(
            num_scalar_prefetch=0,
            grid=(n_tiles, nk),                                   # reduction last
            in_specs=[
                # Point-major expanded-quadratic coeffs (MXU LHS of ramp matmul);
                # consumed whole by the matmul -> no per-feature column slicing.
                pl.BlockSpec((POINT_CHUNK, 8), lambda i, k: (k, 0)),
                # Feature-major payload [w*r, w*g, w*b, w, w*d, 0..] (MXU LHS).
                pl.BlockSpec((8, POINT_CHUNK), lambda i, k: (0, k)),
                # Per-row-tile pixel basis [1, c^2+r^2, c, r, 0..]; block index
                # depends only on i -> fetched once per row tile, no per-k work.
                pl.BlockSpec((8, p), lambda i, k: (0, i)),
            ],
            out_specs=pl.BlockSpec((5, p), lambda i, k: (0, i)),
            scratch_shapes=[pltpu.VMEM((8, p), jnp.float32)]),    # weighted sums
        compiler_params=pltpu.CompilerParams(
            dimension_semantics=("parallel", "arbitrary"),
            vmem_limit_bytes=_vmem_limit_bytes()),
    )(geo, payload, basis)


def _axis_angle_to_matrix(aa):
    angle = jnp.sqrt(jnp.sum(aa * aa) + 1e-20)
    axis = aa / angle
    x, y, z = axis[0], axis[1], axis[2]
    c, s = jnp.cos(angle), jnp.sin(angle)
    cc = 1.0 - c
    return jnp.stack([
        jnp.stack([c + x * x * cc, x * y * cc - z * s, x * z * cc + y * s]),
        jnp.stack([y * x * cc + z * s, c + y * y * cc, y * z * cc - x * s]),
        jnp.stack([z * x * cc - y * s, z * y * cc + x * s, c + z * z * cc]),
    ])


def scene_forward(vert_pos, vert_col, vert_rad, cam_params, gamma, max_depth):
    """Mirrors SceneModel.forward: returns (image (H,W,3), forward_info)."""
    cam_pos = cam_params[:3]
    cam_rot = cam_params[3:6]
    focal = cam_params[6]
    sensor_w = cam_params[7]

    # Pinhole projection (right-handed camera looks down -z_cam) — cheap glue.
    rot = _axis_angle_to_matrix(cam_rot)
    p_cam = (vert_pos - cam_pos[None, :]) @ rot.T
    depth = -p_cam[:, 2]
    valid = depth > 1e-6
    d_safe = jnp.where(valid, depth, 1.0)
    pix = sensor_w / WIDTH
    # CENTERED pixel coordinates: keeps the expanded-quadratic cross terms small
    # so f32 cancellation error in the ramp stays negligible at full scale.
    px = p_cam[:, 0] * focal / d_safe / pix
    py = -p_cam[:, 1] * focal / d_safe / pix
    r_px = jnp.maximum(vert_rad * focal / d_safe / pix, R_MIN_PX)
    d_n = jnp.clip(depth / max_depth, 0.0, 1.0)
    mask = (valid & (depth <= max_depth)).astype(jnp.float32)

    # Per-point precompute hoisted out of the kernel: depth-softmax weight,
    # premultiplied colours/depth and the expanded-quadratic ramp coefficients.
    w_blend = jnp.exp((1.0 - d_n) / gamma) * mask
    k_pt = COV_SHARPNESS / (8.0 * r_px)                  # bounded via R_MIN_PX
    a_pt = k_pt * r_px * r_px + 0.5
    g0 = mask * (a_pt - k_pt * (px * px + py * py))
    g1 = mask * (-k_pt)
    g2 = mask * (2.0 * k_pt * px)
    g3 = mask * (2.0 * k_pt * py)

    # Pad points to a chunk-aligned table (masked/padded points contribute 0).
    n = vert_pos.shape[0]
    npad = ((n + POINT_CHUNK - 1) // POINT_CHUNK) * POINT_CHUNK
    pad = npad - n
    padf = lambda v: jnp.pad(v, (0, pad))
    zeros = jnp.zeros((npad,), jnp.float32)

    geo = jnp.stack([padf(g0), padf(g1), padf(g2), padf(g3),
                     zeros, zeros, zeros, zeros],
                    axis=1).astype(jnp.float32)                      # (Npad, 8)
    payload = jnp.stack([padf(w_blend * vert_col[:, 0]),
                         padf(w_blend * vert_col[:, 1]),
                         padf(w_blend * vert_col[:, 2]),
                         padf(w_blend),
                         padf(w_blend * d_n),
                         zeros, zeros, zeros],
                        axis=0).astype(jnp.float32)                  # (8, Npad)

    # Lane-dense pixel basis over the (row-padded, lane-padded) image; rows are
    # [1, c^2+r^2, c, r, 0, 0, 0, 0] with centered coordinates.
    width_pad = ((WIDTH + 127) // 128) * 128
    height_pad = ((HEIGHT + TILE_H - 1) // TILE_H) * TILE_H          # no assert
    n_tiles = height_pad // TILE_H
    p = TILE_H * width_pad
    flat = jnp.arange(height_pad * width_pad, dtype=jnp.int32)
    row_c = (flat // width_pad).astype(jnp.float32) - (HEIGHT - 1) * 0.5
    col_c = (flat % width_pad).astype(jnp.float32) - (WIDTH - 1) * 0.5
    ones = jnp.ones_like(row_c)
    zrow = jnp.zeros_like(row_c)
    basis = jnp.stack([ones, col_c * col_c + row_c * row_c, col_c, row_c,
                       zrow, zrow, zrow, zrow], axis=0)              # (8, HP*WP)

    out = _render_pallas(geo, payload, basis, n_tiles, p, max_depth)
    out = out.reshape(5, height_pad, width_pad)[:, :HEIGHT, :WIDTH]
    image = jnp.transpose(out[0:3], (1, 2, 0))          # (H, W, 3) like pulsar
    # TODO(synk): forward_info carries (weight-sum, weighted-mean depth) rather
    #             than pulsar's n_track nearest-sphere id/depth payload.
    forward_info = jnp.transpose(out[3:5], (1, 2, 0))   # (H, W, 2) simplified
    return image, forward_info


if __name__ == "__main__":
    # Deterministic parameter construction mirroring SceneModel.__init__
    # (shapes/recipe only; torch.manual_seed(1) is replaced by PRNGKey(0)).
    key = jax.random.PRNGKey(0)
    vert_pos = jax.random.uniform(key, (N_POINTS, 3), dtype=jnp.float32) * 10.0
    vert_pos = vert_pos.at[:, 2].add(25.0)
    vert_pos = vert_pos.at[:, :2].add(-5.0)
    vert_col = jnp.ones((N_POINTS, 3), jnp.float32) * 0.5
    vert_rad = jnp.ones((N_POINTS,), jnp.float32) * 0.05
    # opacity parameter exists in the module but is unused by forward(); skipped.
    cam_params = jnp.array([0.0, 0.0, 0.0, 0.0, math.pi, 0.0, 5.0, 2.0],
                           jnp.float32)

    image, forward_info = scene_forward(vert_pos, vert_col, vert_rad,
                                        cam_params, GAMMA, MAX_DEPTH)
    jax.block_until_ready(image)
    jax.block_until_ready(forward_info)
    assert image.shape == (HEIGHT, WIDTH, 3) and image.dtype == jnp.float32
    assert forward_info.shape == (HEIGHT, WIDTH, 2)
    assert bool(jnp.all(jnp.isfinite(image)))
    assert bool(jnp.all(jnp.isfinite(forward_info)))
    print("KERNEL_OK")
</pallas_src>

<mosaic_0001>
module attributes {stable_mosaic.version = 11 : i64} {
  func.func @_splat_kernel(%arg0: i32, %arg1: i32, %arg2: memref<128x8xf32, #tpu.memory_space<vmem>>, %arg3: memref<8x128xf32, #tpu.memory_space<vmem>>, %arg4: memref<8x1024xf32, #tpu.memory_space<vmem>>, %arg5: memref<5x1024xf32, #tpu.memory_space<vmem>>, %arg6: memref<8x1024xf32, #tpu.memory_space<vmem>>) attributes {dimension_semantics = [#tpu.dimension_semantics<parallel>, #tpu.dimension_semantics<arbitrary>], iteration_bounds = array<i64: 4, 2>, scalar_prefetch = 0 : i64, scratch_operands = 1 : i64, tpu.core_type = #tpu.core_type<tc>, window_params = [{transform_indices = @transform_0, window_bounds = array<i64: 128, 8>}, {transform_indices = @transform_1, window_bounds = array<i64: 8, 128>}, {transform_indices = @transform_2, window_bounds = array<i64: 8, 1024>}, {transform_indices = @transform_3, window_bounds = array<i64: 5, 1024>}]} {
    %c0_i32 = arith.constant 0 : i32
    %0 = arith.cmpi eq, %arg1, %c0_i32 : i32
    %1 = arith.extui %0 : i1 to i32
    %c0_i32_0 = arith.constant 0 : i32
    %2 = arith.cmpi ne, %1, %c0_i32_0 : i32
    scf.if %2 {
      %cst_14 = arith.constant 0.000000e+00 : f32
      %18 = vector.broadcast %cst_14 : f32 to vector<8x1024xf32>
      %c0_15 = arith.constant 0 : index
      %c0_16 = arith.constant 0 : index
      %19 = vector.load %arg6[%c0_15, %c0_16] : memref<8x1024xf32, #tpu.memory_space<vmem>>, vector<8x1024xf32>
      tpu.vector_store %arg6[%c0_15, %c0_16], %18 {strides = array<i32>} : memref<8x1024xf32, #tpu.memory_space<vmem>>, vector<8x1024xf32>,
    } else {
    }
    %c0 = arith.constant 0 : index
    %c0_1 = arith.constant 0 : index
    %3 = vector.load %arg2[%c0, %c0_1] : memref<128x8xf32, #tpu.memory_space<vmem>>, vector<128x8xf32>
    %c0_2 = arith.constant 0 : index
    %c0_3 = arith.constant 0 : index
    %4 = vector.load %arg4[%c0_2, %c0_3] : memref<8x1024xf32, #tpu.memory_space<vmem>>, vector<8x1024xf32>
    %cst = arith.constant dense<0.000000e+00> : vector<128x1024xf32>
    %5 = tpu.matmul %3, %4, %cst {dimension_numbers = #tpu.dot_dimension_numbers<[1], [0], [0], [1], [0, 0, 1, 1], [], []>} : vector<128x8xf32>, vector<8x1024xf32>, vector<128x1024xf32> -> vector<128x1024xf32>
    %cst_4 = arith.constant 0.000000e+00 : f32
    %cst_5 = arith.constant 1.000000e+00 : f32
    %6 = vector.broadcast %cst_4 : f32 to vector<128x1024xf32>
    %7 = arith.maximumf %6, %5 : vector<128x1024xf32>
    %8 = vector.broadcast %cst_5 : f32 to vector<128x1024xf32>
    %9 = arith.minimumf %8, %7 : vector<128x1024xf32>
    %c0_6 = arith.constant 0 : index
    %c0_7 = arith.constant 0 : index
    %10 = vector.load %arg6[%c0_6, %c0_7] : memref<8x1024xf32, #tpu.memory_space<vmem>>, vector<8x1024xf32>
    %c0_8 = arith.constant 0 : index
    %c0_9 = arith.constant 0 : index
    %11 = vector.load %arg3[%c0_8, %c0_9] : memref<8x128xf32, #tpu.memory_space<vmem>>, vector<8x128xf32>
    %cst_10 = arith.constant dense<0.000000e+00> : vector<8x1024xf32>
    %12 = tpu.matmul %11, %9, %cst_10 {dimension_numbers = #tpu.dot_dimension_numbers<[1], [0], [0], [1], [0, 0, 1, 1], [], []>} : vector<8x128xf32>, vector<128x1024xf32>, vector<8x1024xf32> -> vector<8x1024xf32>
    %13 = arith.addf %10, %12 : vector<8x1024xf32>
    %c0_11 = arith.constant 0 : index
    %c0_12 = arith.constant 0 : index
    %14 = vector.load %arg6[%c0_11, %c0_12] : memref<8x1024xf32, #tpu.memory_space<vmem>>, vector<8x1024xf32>
    tpu.vector_store %arg6[%c0_11, %c0_12], %13 {strides = array<i32>} : memref<8x1024xf32, #tpu.memory_space<vmem>>, vector<8x1024xf32>,
    %c1_i32 = arith.constant 1 : i32
    %15 = arith.cmpi eq, %arg1, %c1_i32 : i32
    %16 = arith.extui %15 : i1 to i32
    %c0_i32_13 = arith.constant 0 : i32
    %17 = arith.cmpi ne, %16, %c0_i32_13 : i32
    scf.if %17 {
      %c3 = arith.constant 3 : index
      %c0_14 = arith.constant 0 : index
      %18 = vector.load %arg6[%c3, %c0_14] : memref<8x1024xf32, #tpu.memory_space<vmem>>, vector<1x1024xf32>
      %cst_15 = arith.constant 1.000000e+00 : f32
      %19 = vector.broadcast %cst_15 : f32 to vector<1x1024xf32>
      %20 = arith.addf %18, %19 : vector<1x1024xf32>
      %21 = tpu.reciprocal %20 {approx = true} : vector<1x1024xf32> -> vector<1x1024xf32>
      %c0_16 = arith.constant 0 : index
      %c0_17 = arith.constant 0 : index
      %22 = vector.load %arg6[%c0_16, %c0_17] : memref<8x1024xf32, #tpu.memory_space<vmem>>, vector<3x1024xf32>
      %23 = vector.broadcast %21 : vector<1x1024xf32> to vector<3x1024xf32>
      %24 = arith.mulf %22, %23 : vector<3x1024xf32>
      %c0_18 = arith.constant 0 : index
      %c0_19 = arith.constant 0 : index
      %25 = vector.load %arg5[%c0_18, %c0_19] : memref<5x1024xf32, #tpu.memory_space<vmem>>, vector<3x1024xf32>
      tpu.vector_store %arg5[%c0_18, %c0_19], %24 {strides = array<i32>} : memref<5x1024xf32, #tpu.memory_space<vmem>>, vector<3x1024xf32>,
      %c3_20 = arith.constant 3 : index
      %c0_21 = arith.constant 0 : index
      %26 = vector.load %arg5[%c3_20, %c0_21] : memref<5x1024xf32, #tpu.memory_space<vmem>>, vector<1x1024xf32>
      tpu.vector_store %arg5[%c3_20, %c0_21], %18 {strides = array<i32>} : memref<5x1024xf32, #tpu.memory_space<vmem>>, vector<1x1024xf32>,
      %c4 = arith.constant 4 : index
      %c0_22 = arith.constant 0 : index
      %27 = vector.load %arg6[%c4, %c0_22] : memref<8x1024xf32, #tpu.memory_space<vmem>>, vector<1x1024xf32>
      %cst_23 = arith.constant 1.000000e+00 : f32
      %28 = vector.broadcast %cst_23 : f32 to vector<1x1024xf32>
      %29 = arith.addf %27, %28 : vector<1x1024xf32>
      %30 = arith.mulf %29, %21 : vector<1x1024xf32>
      %cst_24 = arith.constant 4.500000e+01 : f32
      %31 = vector.broadcast %cst_24 : f32 to vector<1x1024xf32>
      %32 = arith.mulf %30, %31 : vector<1x1024xf32>
      %c4_25 = arith.constant 4 : index
      %c0_26 = arith.constant 0 : index
      %33 = vector.load %arg5[%c4_25, %c0_26] : memref<5x1024xf32, #tpu.memory_space<vmem>>, vector<1x1024xf32>
      tpu.vector_store %arg5[%c4_25, %c0_26], %32 {strides = array<i32>} : memref<5x1024xf32, #tpu.memory_space<vmem>>, vector<1x1024xf32>,
    } else {
    }
    return
  }
  func.func @transform_0(%arg0: i32, %arg1: i32) -> (i32, i32) {
    %c0_i32 = arith.constant 0 : i32
    %c0_i32_0 = arith.constant 0 : i32
    return %arg1, %c0_i32 : i32, i32
  }
  func.func @transform_1(%arg0: i32, %arg1: i32) -> (i32, i32) {
    %c0_i32 = arith.constant 0 : i32
    %c0_i32_0 = arith.constant 0 : i32
    return %c0_i32, %arg1 : i32, i32
  }
  func.func @transform_2(%arg0: i32, %arg1: i32) -> (i32, i32) {
    %c0_i32 = arith.constant 0 : i32
    %c0_i32_0 = arith.constant 0 : i32
    return %c0_i32, %arg0 : i32, i32
  }
  func.func @transform_3(%arg0: i32, %arg1: i32) -> (i32, i32) {
    %c0_i32 = arith.constant 0 : i32
    %c0_i32_0 = arith.constant 0 : i32
    return %c0_i32, %arg0 : i32, i32
  }
}

</mosaic_0001>

<llo_original>
// kernel: tpu_custom_call.1
$region0: #{tpu_custom_call.1}
  #allocation0 [shape = 'u32[]', space=smem, size = 0x4, offset = 0x4, fixed_abs, tag = 'smem constant byte address 0x4 - core index']
  #allocation1 [shape = 'u32[144,128]{1,0:T(1,128)}', space=vmem, size = 0x12000, scoped, tag = 'internal scratch']
  #allocation2 [shape = 'f32[8,1024]{1,0:T(8,128)}', space=vmem, size = 0x8000, scoped, tag = 'scratch operand']
  %s0 = inlined_call_operand.vmem [shape: f32[256,8], index: 0, kind: input, shape index: {}]
  %s1 = inlined_call_operand.vmem [shape: f32[8,256], index: 1, kind: input, shape index: {}]
  %s2 = inlined_call_operand.vmem [shape: f32[8,4096], index: 2, kind: input, shape index: {}]
  %s3 = inlined_call_operand.hbm [shape: f32[5,4096], index: 3, kind: output, shape index: {}]
  %s4 = sld [smem:[#allocation0]]
  $region53: #{tpu_custom_call.1} parent=0
    _
  %s6 = ssub.s32 1, %s4
  %s7 = scalar_select 0, %s6, %s4
  $region1: #{tpu_custom_call.1} parent=0
    #allocation3 [shape = 'u8[65536]{0}', space=vmem, size = 0x10000, scoped, tag = 'output window, operand 0']
    #allocation4 [shape = 's32[2]{0}', space=sflag, size = 0x8, scoped, tag = 'scoped memory for tpu_custom_call.1']
    %8 = vsyncpa [#allocation4], 0
    %s9 = scalar_lea.sflag [#allocation4], 1
    %10 = vsyncpa %s9, 0
    loop: start=0, step=1, limit=10
    $region2: #{tpu_custom_call.1} parent=1 // loop_pre_header
      _
    $region3: #{tpu_custom_call.1} parent=1 // loop_header
      %s12 = sphi 0, %s16
      %p13 = scmp.ge.s32.totalorder %s12, 10
      %s19 = sphi 0, %s31
      %s20 = sphi 0, %s27
      %s21 = sphi 0, %s19
      %s22 = sphi 0, %s20
      %s23 = sphi 0, %s21
      %s24 = sphi 0, %s22
      %s34 = sphi 0, %s36
      %s37 = sphi 0, %s34
      %s38 = sphi 0, %s37
      %s54 = sphi 0, %s38
      %s60 = sphi 0, %s62
      %s63 = sphi 0, %s60
      %s64 = sphi 0, %s63
      %s80 = sphi 0, %s64
      %s86 = sphi 0, %s88
      %s89 = sphi 0, %s86
      %s90 = sphi 0, %s89
      %s106 = sphi 0, %s90
      %s112 = sphi 0, %s114
      %s115 = sphi 0, %s112
      %s116 = sphi 0, %s115
      %s132 = sphi 0, %s116
    $region4: #{tpu_custom_call.1} parent=1 // loop_header_branch
      %15 = sbr.rel (%p13) target = $region8
    $region5: #{tpu_custom_call.1} parent=1 // loop_body
      %s17 = ssub.s32 %s12, 1
      %s18 = ssub.s32 %s12, 2
      %s25 = sadd.s32 1, %s20
      %p26 = scmp.ge.s32.totalorder %s25, 2
      %s27 = scalar_select %p26, 0, %s25
      %s28 = sadd.s32 1, %s19
      %s29 = scalar_select %p26, %s28, %s19
      %p30 = scmp.ge.s32.totalorder %s29, 4
      %s31 = scalar_select %p30, 0, %s29
      %s32 = ssub.s32 %s20, %s27
      %p33 = scmp.eq.s32.totalorder %s32, 0
      %s35 = sadd.s32 %s34, 1
      %s36 = scalar_select %p33, %s34, %s35
      %p39 = pneg %p33
      %p40 = scmp.eq.s32.totalorder %s12, 7
      %p41 = por %p39, %p40
      %p42 = scmp.ne.s32.totalorder %s34, %s37
      %p43 = scmp.eq.s32.totalorder %s12, 0
      %p44 = por %p42, %p43
      %p45 = scmp.ne.s32.totalorder %s34, %s37
      %p46 = scmp.eq.s32.totalorder %s17, 7
      %p47 = por %p45, %p46
      %p48 = scmp.ne.s32.totalorder %s37, %s38
      %p49 = scmp.eq.s32.totalorder %s17, 0
      %p50 = por %p48, %p49
      %p51 = scmp.ne.s32.totalorder %s37, %s38
      %p52 = scmp.eq.s32.totalorder %s18, 7
      %p53 = por %p51, %p52
      %p55 = scmp.ne.s32.totalorder %s38, %s54
      %p56 = scmp.eq.s32.totalorder %s18, 0
      %p57 = por %p55, %p56
      %s58 = ssub.s32 %s20, %s27
      %p59 = scmp.eq.s32.totalorder %s58, 0
      %s61 = sadd.s32 %s60, 1
      %s62 = scalar_select %p59, %s60, %s61
      %p65 = pneg %p59
      %p66 = scmp.eq.s32.totalorder %s12, 7
      %p67 = por %p65, %p66
      %p68 = scmp.ne.s32.totalorder %s60, %s63
      %p69 = scmp.eq.s32.totalorder %s12, 0
      %p70 = por %p68, %p69
      %p71 = scmp.ne.s32.totalorder %s60, %s63
      %p72 = scmp.eq.s32.totalorder %s17, 7
      %p73 = por %p71, %p72
      %p74 = scmp.ne.s32.totalorder %s63, %s64
      %p75 = scmp.eq.s32.totalorder %s17, 0
      %p76 = por %p74, %p75
      %p77 = scmp.ne.s32.totalorder %s63, %s64
      %p78 = scmp.eq.s32.totalorder %s18, 7
      %p79 = por %p77, %p78
      %p81 = scmp.ne.s32.totalorder %s64, %s80
      %p82 = scmp.eq.s32.totalorder %s18, 0
      %p83 = por %p81, %p82
      %s84 = ssub.s32 %s19, %s31
      %p85 = scmp.eq.s32.totalorder %s84, 0
      %s87 = sadd.s32 %s86, 1
      %s88 = scalar_select %p85, %s86, %s87
      %p91 = pneg %p85
      %p92 = scmp.eq.s32.totalorder %s12, 7
      %p93 = por %p91, %p92
      %p94 = scmp.ne.s32.totalorder %s86, %s89
      %p95 = scmp.eq.s32.totalorder %s12, 0
      %p96 = por %p94, %p95
      %p97 = scmp.ne.s32.totalorder %s86, %s89
      %p98 = scmp.eq.s32.totalorder %s17, 7
      %p99 = por %p97, %p98
      %p100 = scmp.ne.s32.totalorder %s89, %s90
      %p101 = scmp.eq.s32.totalorder %s17, 0
      %p102 = por %p100, %p101
      %p103 = scmp.ne.s32.totalorder %s89, %s90
      %p104 = scmp.eq.s32.totalorder %s18, 7
      %p105 = por %p103, %p104
      %p107 = scmp.ne.s32.totalorder %s90, %s106
      %p108 = scmp.eq.s32.totalorder %s18, 0
      %p109 = por %p107, %p108
      %s110 = ssub.s32 %s19, %s31
      %p111 = scmp.eq.s32.totalorder %s110, 0
      %s113 = sadd.s32 %s112, 1
      %s114 = scalar_select %p111, %s112, %s113
      %p117 = pneg %p111
      %p118 = scmp.eq.s32.totalorder %s12, 7
      %p119 = por %p117, %p118
      %p120 = scmp.ne.s32.totalorder %s112, %s115
      %p121 = scmp.eq.s32.totalorder %s12, 0
      %p122 = por %p120, %p121
      %p123 = scmp.ne.s32.totalorder %s112, %s115
      %p124 = scmp.eq.s32.totalorder %s17, 7
      %p125 = por %p123, %p124
      %p126 = scmp.ne.s32.totalorder %s115, %s116
      %p127 = scmp.eq.s32.totalorder %s17, 0
      %p128 = por %p126, %p127
      %p129 = scmp.ne.s32.totalorder %s115, %s116
      %p130 = scmp.eq.s32.totalorder %s18, 7
      %p131 = por %p129, %p130
      %p133 = scmp.ne.s32.totalorder %s116, %s132
      %p134 = scmp.eq.s32.totalorder %s18, 0
      %p135 = por %p133, %p134
      %p136 = scmp.le.s32.totalorder 1, %s12
      %p137 = scmp.lt.s32.totalorder %s12, 9
      %p138 = pnand %p136, %p137
      %p139 = pneg %p138
      // Predicated region
      $region9: #{tpu_custom_call.1} parent=5 // pred_check
        _
      $region10: #{tpu_custom_call.1} parent=5 // pred_check_branch
        %141 = sbr.rel (%p138) target = $region12
      $region11: #{tpu_custom_call.1} parent=5 // pred_region
        %s142 = ssub.s32 %s12, 1
      $region12: #{tpu_custom_call.1} parent=5 // pred_fallthru
        _
      %p143 = scmp.lt.s32.totalorder %s12, 8
      // Predicated region
      $region13: #{tpu_custom_call.1} parent=5 // pred_check
        %p144 = pneg %p143
      $region14: #{tpu_custom_call.1} parent=5 // pred_check_branch
        %146 = sbr.rel (%p144) target = $region16
      $region15: #{tpu_custom_call.1} parent=5 // pred_region
        // Predicated region
        $region17: #{tpu_custom_call.1} parent=15 // pred_check
          %p147 = pneg %p44
        $region18: #{tpu_custom_call.1} parent=15 // pred_check_branch
          %149 = sbr.rel (%p147) target = $region20
        $region19: #{tpu_custom_call.1} parent=15 // pred_region
          %s150 = smul.u32 16, %s20
          %p151 = scmp.lt.s32.totalorder %s150, 31
          %s152 = scalar_select %p151, %s150, 31
          %s153 = smul.addr %s152, 8
          %s154 = scalar_lea.vmem %s0, %s153
          %s155 = smul.u32 16, %s20
        $region20: #{tpu_custom_call.1} parent=15 // pred_fallthru
          _
        // Predicated region
        $region21: #{tpu_custom_call.1} parent=15 // pred_check
          %p156 = pneg %p70
        $region22: #{tpu_custom_call.1} parent=15 // pred_check_branch
          %158 = sbr.rel (%p156) target = $region24
        $region23: #{tpu_custom_call.1} parent=15 // pred_region
          %p159 = scmp.lt.s32.totalorder %s20, 1
          %s160 = scalar_select %p159, %s20, 1
          %s161 = smul.addr %s160, 8
          %s162 = scalar_lea.vmem %s1, %s161
        $region24: #{tpu_custom_call.1} parent=15 // pred_fallthru
          _
        // Predicated region
        $region25: #{tpu_custom_call.1} parent=15 // pred_check
          %p163 = pneg %p96
        $region26: #{tpu_custom_call.1} parent=15 // pred_check_branch
          %165 = sbr.rel (%p163) target = $region28
        $region27: #{tpu_custom_call.1} parent=15 // pred_region
          %s166 = smul.u32 8, %s19
          %p167 = scmp.lt.s32.totalorder %s166, 31
          %s168 = scalar_select %p167, %s166, 31
          %s169 = smul.addr %s168, 8
          %s170 = scalar_lea.vmem %s2, %s169
          %s171 = smul.u32 8, %s19
        $region28: #{tpu_custom_call.1} parent=15 // pred_fallthru
          _
      $region16: #{tpu_custom_call.1} parent=5 // pred_fallthru
        _
      %p172 = scmp.le.s32.totalorder 1, %s12
      %p173 = scmp.lt.s32.totalorder %s12, 9
      %p174 = pnand %p172, %p173
      %p175 = pneg %p174
      // Predicated region
      $region29: #{tpu_custom_call.1} parent=5 // pred_check
        _
      $region30: #{tpu_custom_call.1} parent=5 // pred_check_branch
        %177 = sbr.rel (%p174) target = $region32
      $region31: #{tpu_custom_call.1} parent=5 // pred_region
        %s178 = ssub.s32 %s12, 1
        %s179 = smul.u32 16, %s22
        %p180 = scmp.lt.s32.totalorder %s179, 31
        %s181 = scalar_select %p180, %s179, 31
        %s182 = smul.addr %s181, 8
        %s183 = scalar_lea.vmem %s0, %s182
        %p184 = pneg %p50
        %p185 = pneg %p47
        %p186 = scmp.lt.s32.totalorder %s22, 1
        %s187 = scalar_select %p186, %s22, 1
        %s188 = smul.addr %s187, 8
        %s189 = scalar_lea.vmem %s1, %s188
        %p190 = pneg %p76
        %p191 = pneg %p73
        %s192 = smul.u32 8, %s21
        %p193 = scmp.lt.s32.totalorder %s192, 31
        %s194 = scalar_select %p193, %s192, 31
        %s195 = smul.addr %s194, 8
        %s196 = scalar_lea.vmem %s2, %s195
        %p197 = pneg %p102
        %p198 = pneg %p99
        %p199 = pneg %p128
        %p200 = pneg %p125
        %s201 = sand.u32 %s115, 1
        %s202 = scalar_lea.sflag [#allocation4], %s201
        %s203 = sand.u32 %s115, 1
        %s204 = smul.addr %s203, 64
        %s205 = scalar_lea.vmem [#allocation3], %s204
        %s206 = smul.u32 16, %s22
        %p207 = scmp.lt.s32.totalorder %s206, 31
        %s208 = scalar_select %p207, %s206, 31
        %s209 = smul.addr %s208, 8
        %s210 = scalar_lea.vmem %s0, %s209
        %s211 = smul.u32 16, %s22
        %p212 = scmp.lt.s32.totalorder %s22, 1
        %s213 = scalar_select %p212, %s22, 1
        %s214 = smul.addr %s213, 8
        %s215 = scalar_lea.vmem %s1, %s214
        %s216 = smul.u32 8, %s21
        %p217 = scmp.lt.s32.totalorder %s216, 31
        %s218 = scalar_select %p217, %s216, 31
        %s219 = smul.addr %s218, 8
        %s220 = scalar_lea.vmem %s2, %s219
        %s221 = smul.u32 8, %s21
        %s222 = smul.u32 8, %s21
        %p223 = scmp.eq.s32.totalorder %s22, 0
        // Predicated region
        $region33: #{tpu_custom_call.1} parent=31 // pred_check
          %p224 = pneg %p223
        $region34: #{tpu_custom_call.1} parent=31 // pred_check_branch
          %226 = sbr.rel (%p224) target = $region36
        $region35: #{tpu_custom_call.1} parent=31 // pred_region
          %227 = vst [vmem:[#allocation2] sm:$0xff] 0.0
          %228 = vst [vmem:[#allocation2 + $0x8] sm:$0xff] 0.0
          %229 = vst [vmem:[#allocation2 + $0x10] sm:$0xff] 0.0
          %230 = vst [vmem:[#allocation2 + $0x18] sm:$0xff] 0.0
          %231 = vst [vmem:[#allocation2 + $0x20] sm:$0xff] 0.0
          %232 = vst [vmem:[#allocation2 + $0x28] sm:$0xff] 0.0
          %233 = vst [vmem:[#allocation2 + $0x30] sm:$0xff] 0.0
          %234 = vst [vmem:[#allocation2 + $0x38] sm:$0xff] 0.0
        $region36: #{tpu_custom_call.1} parent=31 // pred_fallthru
          _
        %v235 = vld [vmem:[%s210] sm:$0xff]
        %v236 = vld [vmem:[%s210 + $0x8] sm:$0xff]
        %v237 = vld [vmem:[%s210 + $0x10] sm:$0xff]
        %v238 = vld [vmem:[%s210 + $0x18] sm:$0xff]
        %v239 = vld [vmem:[%s210 + $0x20] sm:$0xff]
        %v240 = vld [vmem:[%s210 + $0x28] sm:$0xff]
        %v241 = vld [vmem:[%s210 + $0x30] sm:$0xff]
        %v242 = vld [vmem:[%s210 + $0x38] sm:$0xff]
        %v243 = vld [vmem:[%s210 + $0x40] sm:$0xff]
        %v244 = vld [vmem:[%s210 + $0x48] sm:$0xff]
        %v245 = vld [vmem:[%s210 + $0x50] sm:$0xff]
        %v246 = vld [vmem:[%s210 + $0x58] sm:$0xff]
        %v247 = vld [vmem:[%s210 + $0x60] sm:$0xff]
        %v248 = vld [vmem:[%s210 + $0x68] sm:$0xff]
        %v249 = vld [vmem:[%s210 + $0x70] sm:$0xff]
        %v250 = vld [vmem:[%s210 + $0x78] sm:$0xff]
        %v251 = vld [vmem:[%s220] sm:$0xff]
        %v252 = vld [vmem:[%s220 + $0x8] sm:$0xff]
        %v253 = vld [vmem:[%s220 + $0x10] sm:$0xff]
        %v254 = vld [vmem:[%s220 + $0x18] sm:$0xff]
        %v255 = vld [vmem:[%s220 + $0x20] sm:$0xff]
        %v256 = vld [vmem:[%s220 + $0x28] sm:$0xff]
        %v257 = vld [vmem:[%s220 + $0x30] sm:$0xff]
        %v258 = vld [vmem:[%s220 + $0x38] sm:$0xff]
        %vm259 = vcmask 64512
        %v261 = vsel %vm259, %v235, 0
        %v264 = vsel %vm259, %v236, 0
        %v267 = vsel %vm259, %v237, 0
        %v270 = vsel %vm259, %v238, 0
        %v273 = vsel %vm259, %v239, 0
        %v276 = vsel %vm259, %v240, 0
        %v279 = vsel %vm259, %v241, 0
        %v282 = vsel %vm259, %v242, 0
        %v285 = vsel %vm259, %v243, 0
        %v288 = vsel %vm259, %v244, 0
        %v291 = vsel %vm259, %v245, 0
        %v294 = vsel %vm259, %v246, 0
        %v297 = vsel %vm259, %v247, 0
        %v300 = vsel %vm259, %v248, 0
        %v303 = vsel %vm259, %v249, 0
        %v306 = vsel %vm259, %v250, 0
        %308 = vmatprep.subr.mxu0 %v252
        %309 = vmatpush1.msra.mxu0 %v251
        %310 = vmatprep.subr.mxu0 0.0
        %311 = vmatpush1.msra.mxu0 0.0
        %312 = vmatprep.subr.mxu0 0.0
        %313 = vmatpush1.msra.mxu0 0.0
        %314 = vmatprep.subr.mxu0 0.0
        %315 = vmatpush1.msra.mxu0 0.0
        %316 = vmatprep.subr.mxu0 0.0
        %317 = vmatpush1.msra.mxu0 0.0
        %318 = vmatprep.subr.mxu0 0.0
        %319 = vmatpush1.msra.mxu0 0.0
        %320 = vmatprep.subr.mxu0 0.0
        %321 = vmatpush1.msra.mxu0 0.0
        %322 = vmatprep.subr.mxu0 0.0
        %323 = vmatpush1.msra.mxu0 0.0
        %324 = vmatprep.subr.mxu0 0.0
        %325 = vmatpush1.msra.mxu0 0.0
        %326 = vmatprep.subr.mxu0 0.0
        %327 = vmatpush1.msra.mxu0 0.0
        %328 = vmatprep.subr.mxu0 0.0
        %329 = vmatpush1.msra.mxu0 0.0
        %330 = vmatprep.subr.mxu0 0.0
        %331 = vmatpush1.msra.mxu0 0.0
        %332 = vmatprep.subr.mxu0 0.0
        %333 = vmatpush1.msra.mxu0 0.0
        %334 = vmatprep.subr.mxu0 0.0
        %335 = vmatpush1.msra.mxu0 0.0
        %336 = vmatprep.subr.mxu0 0.0
        %337 = vmatpush1.msra.mxu0 0.0
        %338 = vmatprep.subr.mxu0 0.0
        %339 = vmatpush1.msra.mxu0 0.0
        %340 = vmatprep.subr.mxu0 0.0
        %341 = vmatpush1.msra.mxu0 0.0
        %342 = vmatprep.subr.mxu0 0.0
        %343 = vmatpush1.msra.mxu0 0.0
        %344 = vmatprep.subr.mxu0 0.0
        %345 = vmatpush1.msra.mxu0 0.0
        %346 = vmatprep.subr.mxu0 0.0
        %347 = vmatpush1.msra.mxu0 0.0
        %348 = vmatprep.subr.mxu0 0.0
        %349 = vmatpush1.msra.mxu0 0.0
        %350 = vmatprep.subr.mxu0 0.0
        %351 = vmatpush1.msra.mxu0 0.0
        %352 = vmatprep.subr.mxu0 0.0
        %353 = vmatpush1.msra.mxu0 0.0
        %354 = vmatprep.subr.mxu0 0.0
        %355 = vmatpush1.msra.mxu0 0.0
        %356 = vmatprep.subr.mxu0 0.0
        %357 = vmatpush1.msra.mxu0 0.0
        %358 = vmatprep.subr.mxu0 0.0
        %359 = vmatpush1.msra.mxu0 0.0
        %360 = vmatprep.subr.mxu0 0.0
        %361 = vmatpush1.msra.mxu0 0.0
        %362 = vmatprep.subr.mxu0 0.0
        %363 = vmatpush1.msra.mxu0 0.0
        %364 = vmatprep.subr.mxu0 0.0
        %365 = vmatpush1.msra.mxu0 0.0
        %366 = vmatprep.subr.mxu0 0.0
        %367 = vmatpush1.msra.mxu0 0.0
        %368 = vmatprep.subr.mxu0 0.0
        %369 = vmatpush1.msra.mxu0 0.0
        %370 = vmatprep.subr.mxu0 0.0
        %371 = vmatpush1.msra.mxu0 0.0
        %372 = vmatprep.mubr.f32.mxu0 0.0
        %373 = vmatmul.mubr.f32.gmra.mrb[0].mxu0 %v261
        %v374 = vpop.f32.mrb[0].mxu0
        %v375 = vadd.f32 0.0, %v374
        %v376 = vpop.f32.mrb[0].mxu0
        %v377 = vadd.f32 0.0, %v376
        %378 = vmatprep.mubr.f32.mxu0 0.0
        %379 = vmatmul.mubr.f32.gmra.mrb[0].mxu0 %v264
        %v380 = vpop.f32.mrb[0].mxu0
        %v381 = vadd.f32 0.0, %v380
        %v382 = vpop.f32.mrb[0].mxu0
        %v383 = vadd.f32 0.0, %v382
        %384 = vmatprep.mubr.f32.mxu0 0.0
        %385 = vmatmul.mubr.f32.gmra.mrb[0].mxu0 %v267
        %v386 = vpop.f32.mrb[0].mxu0
        %v387 = vadd.f32 0.0, %v386
        %v388 = vpop.f32.mrb[0].mxu0
        %v389 = vadd.f32 0.0, %v388
        %390 = vmatprep.mubr.f32.mxu0 0.0
        %391 = vmatmul.mubr.f32.gmra.mrb[0].mxu0 %v270
        %v392 = vpop.f32.mrb[0].mxu0
        %v393 = vadd.f32 0.0, %v392
        %v394 = vpop.f32.mrb[0].mxu0
        %v395 = vadd.f32 0.0, %v394
        %396 = vmatprep.mubr.f32.mxu0 0.0
        %397 = vmatmul.mubr.f32.gmra.mrb[0].mxu0 %v273
        %v398 = vpop.f32.mrb[0].mxu0
        %v399 = vadd.f32 0.0, %v398
        %v400 = vpop.f32.mrb[0].mxu0
        %v401 = vadd.f32 0.0, %v400
        %402 = vmatprep.mubr.f32.mxu0 0.0
        %403 = vmatmul.mubr.f32.gmra.mrb[0].mxu0 %v276
        %v404 = vpop.f32.mrb[0].mxu0
        %v405 = vadd.f32 0.0, %v404
        %v406 = vpop.f32.mrb[0].mxu0
        %v407 = vadd.f32 0.0, %v406
        %408 = vmatprep.mubr.f32.mxu0 0.0
        %409 = vmatmul.mubr.f32.gmra.mrb[0].mxu0 %v279
        %v410 = vpop.f32.mrb[0].mxu0
        %v411 = vadd.f32 0.0, %v410
        %v412 = vpop.f32.mrb[0].mxu0
        %v413 = vadd.f32 0.0, %v412
        %414 = vmatprep.mubr.f32.mxu0 0.0
        %415 = vmatmul.mubr.f32.gmra.mrb[0].mxu0 %v282
        %v416 = vpop.f32.mrb[0].mxu0
        %v417 = vadd.f32 0.0, %v416
        %v418 = vpop.f32.mrb[0].mxu0
        %v419 = vadd.f32 0.0, %v418
        %420 = vmatprep.mubr.f32.mxu0 0.0
        %421 = vmatmul.mubr.f32.gmra.mrb[0].mxu0 %v285
        %v422 = vpop.f32.mrb[0].mxu0
        %v423 = vadd.f32 0.0, %v422
        %v424 = vpop.f32.mrb[0].mxu0
        %v425 = vadd.f32 0.0, %v424
        %426 = vmatprep.mubr.f32.mxu0 0.0
        %427 = vmatmul.mubr.f32.gmra.mrb[0].mxu0 %v288
        %v428 = vpop.f32.mrb[0].mxu0
        %v429 = vadd.f32 0.0, %v428
        %v430 = vpop.f32.mrb[0].mxu0
        %v431 = vadd.f32 0.0, %v430
        %432 = vmatprep.mubr.f32.mxu0 0.0
        %433 = vmatmul.mubr.f32.gmra.mrb[0].mxu0 %v291
        %v434 = vpop.f32.mrb[0].mxu0
        %v435 = vadd.f32 0.0, %v434
        %v436 = vpop.f32.mrb[0].mxu0
        %v437 = vadd.f32 0.0, %v436
        %438 = vmatprep.mubr.f32.mxu0 0.0
        %439 = vmatmul.mubr.f32.gmra.mrb[0].mxu0 %v294
        %v440 = vpop.f32.mrb[0].mxu0
        %v441 = vadd.f32 0.0, %v440
        %v442 = vpop.f32.mrb[0].mxu0
        %v443 = vadd.f32 0.0, %v442
        %444 = vmatprep.mubr.f32.mxu0 0.0
        %445 = vmatmul.mubr.f32.gmra.mrb[0].mxu0 %v297
        %v446 = vpop.f32.mrb[0].mxu0
        %v447 = vadd.f32 0.0, %v446
        %v448 = vpop.f32.mrb[0].mxu0
        %v449 = vadd.f32 0.0, %v448
        %450 = vmatprep.mubr.f32.mxu0 0.0
        %451 = vmatmul.mubr.f32.gmra.mrb[0].mxu0 %v300
        %v452 = vpop.f32.mrb[0].mxu0
        %v453 = vadd.f32 0.0, %v452
        %v454 = vpop.f32.mrb[0].mxu0
        %v455 = vadd.f32 0.0, %v454
        %456 = vmatprep.mubr.f32.mxu0 0.0
        %457 = vmatmul.mubr.f32.gmra.mrb[0].mxu0 %v303
        %v458 = vpop.f32.mrb[0].mxu0
        %v459 = vadd.f32 0.0, %v458
        %v460 = vpop.f32.mrb[0].mxu0
        %v461 = vadd.f32 0.0, %v460
        %462 = vmatprep.mubr.f32.mxu0 0.0
        %463 = vmatmul.mubr.f32.gmra.mrb[0].mxu0 %v306
        %v464 = vpop.f32.mrb[0].mxu0
        %v465 = vadd.f32 0.0, %v464
        %v466 = vpop.f32.mrb[0].mxu0
        %v467 = vadd.f32 0.0, %v466
        %468 = vdwg.mxu0
        %469 = vmatprep.subr.mxu0 %v254
        %470 = vmatpush1.msra.mxu0 %v253
        %471 = vmatprep.subr.mxu0 0.0
        %472 = vmatpush1.msra.mxu0 0.0
        %473 = vmatprep.subr.mxu0 0.0
        %474 = vmatpush1.msra.mxu0 0.0
        %475 = vmatprep.subr.mxu0 0.0
        %476 = vmatpush1.msra.mxu0 0.0
        %477 = vmatprep.subr.mxu0 0.0
        %478 = vmatpush1.msra.mxu0 0.0
        %479 = vmatprep.subr.mxu0 0.0
        %480 = vmatpush1.msra.mxu0 0.0
        %481 = vmatprep.subr.mxu0 0.0
        %482 = vmatpush1.msra.mxu0 0.0
        %483 = vmatprep.subr.mxu0 0.0
        %484 = vmatpush1.msra.mxu0 0.0
        %485 = vmatprep.subr.mxu0 0.0
        %486 = vmatpush1.msra.mxu0 0.0
        %487 = vmatprep.subr.mxu0 0.0
        %488 = vmatpush1.msra.mxu0 0.0
        %489 = vmatprep.subr.mxu0 0.0
        %490 = vmatpush1.msra.mxu0 0.0
        %491 = vmatprep.subr.mxu0 0.0
        %492 = vmatpush1.msra.mxu0 0.0
        %493 = vmatprep.subr.mxu0 0.0
        %494 = vmatpush1.msra.mxu0 0.0
        %495 = vmatprep.subr.mxu0 0.0
        %496 = vmatpush1.msra.mxu0 0.0
        %497 = vmatprep.subr.mxu0 0.0
        %498 = vmatpush1.msra.mxu0 0.0
        %499 = vmatprep.subr.mxu0 0.0
        %500 = vmatpush1.msra.mxu0 0.0
        %501 = vmatprep.subr.mxu0 0.0
        %502 = vmatpush1.msra.mxu0 0.0
        %503 = vmatprep.subr.mxu0 0.0
        %504 = vmatpush1.msra.mxu0 0.0
        %505 = vmatprep.subr.mxu0 0.0
        %506 = vmatpush1.msra.mxu0 0.0
        %507 = vmatprep.subr.mxu0 0.0
        %508 = vmatpush1.msra.mxu0 0.0
        %509 = vmatprep.subr.mxu0 0.0
        %510 = vmatpush1.msra.mxu0 0.0
        %511 = vmatprep.subr.mxu0 0.0
        %512 = vmatpush1.msra.mxu0 0.0
        %513 = vmatprep.subr.mxu0 0.0
        %514 = vmatpush1.msra.mxu0 0.0
        %515 = vmatprep.subr.mxu0 0.0
        %516 = vmatpush1.msra.mxu0 0.0
        %517 = vmatprep.subr.mxu0 0.0
        %518 = vmatpush1.msra.mxu0 0.0
        %519 = vmatprep.subr.mxu0 0.0
        %520 = vmatpush1.msra.mxu0 0.0
        %521 = vmatprep.subr.mxu0 0.0
        %522 = vmatpush1.msra.mxu0 0.0
        %523 = vmatprep.subr.mxu0 0.0
        %524 = vmatpush1.msra.mxu0 0.0
        %525 = vmatprep.subr.mxu0 0.0
        %526 = vmatpush1.msra.mxu0 0.0
        %527 = vmatprep.subr.mxu0 0.0
        %528 = vmatpush1.msra.mxu0 0.0
        %529 = vmatprep.subr.mxu0 0.0
        %530 = vmatpush1.msra.mxu0 0.0
        %531 = vmatprep.subr.mxu0 0.0
        %532 = vmatpush1.msra.mxu0 0.0
        %533 = vmatprep.mubr.f32.mxu0 0.0
        %534 = vmatmul.mubr.f32.gmra.mrb[0].mxu0 %v261
        %v535 = vpop.f32.mrb[0].mxu0
        %v536 = vadd.f32 0.0, %v535
        %v537 = vpop.f32.mrb[0].mxu0
        %v538 = vadd.f32 0.0, %v537
        %539 = vmatprep.mubr.f32.mxu0 0.0
        %540 = vmatmul.mubr.f32.gmra.mrb[0].mxu0 %v264
        %v541 = vpop.f32.mrb[0].mxu0
        %v542 = vadd.f32 0.0, %v541
        %v543 = vpop.f32.mrb[0].mxu0
        %v544 = vadd.f32 0.0, %v543
        %545 = vmatprep.mubr.f32.mxu0 0.0
        %546 = vmatmul.mubr.f32.gmra.mrb[0].mxu0 %v267
        %v547 = vpop.f32.mrb[0].mxu0
        %v548 = vadd.f32 0.0, %v547
        %v549 = vpop.f32.mrb[0].mxu0
        %v550 = vadd.f32 0.0, %v549
        %551 = vmatprep.mubr.f32.mxu0 0.0
        %552 = vmatmul.mubr.f32.gmra.mrb[0].mxu0 %v270
        %v553 = vpop.f32.mrb[0].mxu0
        %v554 = vadd.f32 0.0, %v553
        %v555 = vpop.f32.mrb[0].mxu0
        %v556 = vadd.f32 0.0, %v555
        %557 = vmatprep.mubr.f32.mxu0 0.0
        %558 = vmatmul.mubr.f32.gmra.mrb[0].mxu0 %v273
        %v559 = vpop.f32.mrb[0].mxu0
        %v560 = vadd.f32 0.0, %v559
        %v561 = vpop.f32.mrb[0].mxu0
        %v562 = vadd.f32 0.0, %v561
        %563 = vmatprep.mubr.f32.mxu0 0.0
        %564 = vmatmul.mubr.f32.gmra.mrb[0].mxu0 %v276
        %v565 = vpop.f32.mrb[0].mxu0
        %v566 = vadd.f32 0.0, %v565
        %v567 = vpop.f32.mrb[0].mxu0
        %v568 = vadd.f32 0.0, %v567
        %569 = vmatprep.mubr.f32.mxu0 0.0
        %570 = vmatmul.mubr.f32.gmra.mrb[0].mxu0 %v279
        %v571 = vpop.f32.mrb[0].mxu0
        %v572 = vadd.f32 0.0, %v571
        %v573 = vpop.f32.mrb[0].mxu0
        %v574 = vadd.f32 0.0, %v573
        %575 = vmatprep.mubr.f32.mxu0 0.0
        %576 = vmatmul.mubr.f32.gmra.mrb[0].mxu0 %v282
        %v577 = vpop.f32.mrb[0].mxu0
        %v578 = vadd.f32 0.0, %v577
        %v579 = vpop.f32.mrb[0].mxu0
        %v580 = vadd.f32 0.0, %v579
        %581 = vmatprep.mubr.f32.mxu0 0.0
        %582 = vmatmul.mubr.f32.gmra.mrb[0].mxu0 %v285
        %v583 = vpop.f32.mrb[0].mxu0
        %v584 = vadd.f32 0.0, %v583
        %v585 = vpop.f32.mrb[0].mxu0
        %v586 = vadd.f32 0.0, %v585
        %587 = vmatprep.mubr.f32.mxu0 0.0
        %588 = vmatmul.mubr.f32.gmra.mrb[0].mxu0 %v288
        %v589 = vpop.f32.mrb[0].mxu0
        %v590 = vadd.f32 0.0, %v589
        %v591 = vpop.f32.mrb[0].mxu0
        %v592 = vadd.f32 0.0, %v591
        %593 = vmatprep.mubr.f32.mxu0 0.0
        %594 = vmatmul.mubr.f32.gmra.mrb[0].mxu0 %v291
        %v595 = vpop.f32.mrb[0].mxu0
        %v596 = vadd.f32 0.0, %v595
        %v597 = vpop.f32.mrb[0].mxu0
        %v598 = vadd.f32 0.0, %v597
        %599 = vmatprep.mubr.f32.mxu0 0.0
        %600 = vmatmul.mubr.f32.gmra.mrb[0].mxu0 %v294
        %v601 = vpop.f32.mrb[0].mxu0
        %v602 = vadd.f32 0.0, %v601
        %v603 = vpop.f32.mrb[0].mxu0
        %v604 = vadd.f32 0.0, %v603
        %605 = vmatprep.mubr.f32.mxu0 0.0
        %606 = vmatmul.mubr.f32.gmra.mrb[0].mxu0 %v297
        %v607 = vpop.f32.mrb[0].mxu0
        %v608 = vadd.f32 0.0, %v607
        %v609 = vpop.f32.mrb[0].mxu0
        %v610 = vadd.f32 0.0, %v609
        %611 = vmatprep.mubr.f32.mxu0 0.0
        %612 = vmatmul.mubr.f32.gmra.mrb[0].mxu0 %v300
        %v613 = vpop.f32.mrb[0].mxu0
        %v614 = vadd.f32 0.0, %v613
        %v615 = vpop.f32.mrb[0].mxu0
        %v616 = vadd.f32 0.0, %v615
        %617 = vmatprep.mubr.f32.mxu0 0.0
        %618 = vmatmul.mubr.f32.gmra.mrb[0].mxu0 %v303
        %v619 = vpop.f32.mrb[0].mxu0
        %v620 = vadd.f32 0.0, %v619
        %v621 = vpop.f32.mrb[0].mxu0
        %v622 = vadd.f32 0.0, %v621
        %623 = vmatprep.mubr.f32.mxu0 0.0
        %624 = vmatmul.mubr.f32.gmra.mrb[0].mxu0 %v306
        %v625 = vpop.f32.mrb[0].mxu0
        %v626 = vadd.f32 0.0, %v625
        %v627 = vpop.f32.mrb[0].mxu0
        %v628 = vadd.f32 0.0, %v627
        %629 = vdwg.mxu0
        %630 = vmatprep.subr.mxu0 %v256
        %631 = vmatpush1.msra.mxu0 %v255
        %632 = vmatprep.subr.mxu0 0.0
        %633 = vmatpush1.msra.mxu0 0.0
        %634 = vmatprep.subr.mxu0 0.0
        %635 = vmatpush1.msra.mxu0 0.0
        %636 = vmatprep.subr.mxu0 0.0
        %637 = vmatpush1.msra.mxu0 0.0
        %638 = vmatprep.subr.mxu0 0.0
        %639 = vmatpush1.msra.mxu0 0.0
        %640 = vmatprep.subr.mxu0 0.0
        %641 = vmatpush1.msra.mxu0 0.0
        %642 = vmatprep.subr.mxu0 0.0
        %643 = vmatpush1.msra.mxu0 0.0
        %644 = vmatprep.subr.mxu0 0.0
        %645 = vmatpush1.msra.mxu0 0.0
        %646 = vmatprep.subr.mxu0 0.0
        %647 = vmatpush1.msra.mxu0 0.0
        %648 = vmatprep.subr.mxu0 0.0
        %649 = vmatpush1.msra.mxu0 0.0
        %650 = vmatprep.subr.mxu0 0.0
        %651 = vmatpush1.msra.mxu0 0.0
        %652 = vmatprep.subr.mxu0 0.0
        %653 = vmatpush1.msra.mxu0 0.0
        %654 = vmatprep.subr.mxu0 0.0
        %655 = vmatpush1.msra.mxu0 0.0
        %656 = vmatprep.subr.mxu0 0.0
        %657 = vmatpush1.msra.mxu0 0.0
        %658 = vmatprep.subr.mxu0 0.0
        %659 = vmatpush1.msra.mxu0 0.0
        %660 = vmatprep.subr.mxu0 0.0
        %661 = vmatpush1.msra.mxu0 0.0
        %662 = vmatprep.subr.mxu0 0.0
        %663 = vmatpush1.msra.mxu0 0.0
        %664 = vmatprep.subr.mxu0 0.0
        %665 = vmatpush1.msra.mxu0 0.0
        %666 = vmatprep.subr.mxu0 0.0
        %667 = vmatpush1.msra.mxu0 0.0
        %668 = vmatprep.subr.mxu0 0.0
        %669 = vmatpush1.msra.mxu0 0.0
        %670 = vmatprep.subr.mxu0 0.0
        %671 = vmatpush1.msra.mxu0 0.0
        %672 = vmatprep.subr.mxu0 0.0
        %673 = vmatpush1.msra.mxu0 0.0
        %674 = vmatprep.subr.mxu0 0.0
        %675 = vmatpush1.msra.mxu0 0.0
        %676 = vmatprep.subr.mxu0 0.0
        %677 = vmatpush1.msra.mxu0 0.0
        %678 = vmatprep.subr.mxu0 0.0
        %679 = vmatpush1.msra.mxu0 0.0
        %680 = vmatprep.subr.mxu0 0.0
        %681 = vmatpush1.msra.mxu0 0.0
        %682 = vmatprep.subr.mxu0 0.0
        %683 = vmatpush1.msra.mxu0 0.0
        %684 = vmatprep.subr.mxu0 0.0
        %685 = vmatpush1.msra.mxu0 0.0
        %686 = vmatprep.subr.mxu0 0.0
        %687 = vmatpush1.msra.mxu0 0.0
        %688 = vmatprep.subr.mxu0 0.0
        %689 = vmatpush1.msra.mxu0 0.0
        %690 = vmatprep.subr.mxu0 0.0
        %691 = vmatpush1.msra.mxu0 0.0
        %692 = vmatprep.subr.mxu0 0.0
        %693 = vmatpush1.msra.mxu0 0.0
        %694 = vmatprep.mubr.f32.mxu0 0.0
        %695 = vmatmul.mubr.f32.gmra.mrb[0].mxu0 %v261
        %v696 = vpop.f32.mrb[0].mxu0
        %v697 = vadd.f32 0.0, %v696
        %v698 = vpop.f32.mrb[0].mxu0
        %v699 = vadd.f32 0.0, %v698
        %700 = vmatprep.mubr.f32.mxu0 0.0
        %701 = vmatmul.mubr.f32.gmra.mrb[0].mxu0 %v264
        %v702 = vpop.f32.mrb[0].mxu0
        %v703 = vadd.f32 0.0, %v702
        %v704 = vpop.f32.mrb[0].mxu0
        %v705 = vadd.f32 0.0, %v704
        %706 = vmatprep.mubr.f32.mxu0 0.0
        %707 = vmatmul.mubr.f32.gmra.mrb[0].mxu0 %v267
        %v708 = vpop.f32.mrb[0].mxu0
        %v709 = vadd.f32 0.0, %v708
        %v710 = vpop.f32.mrb[0].mxu0
        %v711 = vadd.f32 0.0, %v710
        %712 = vmatprep.mubr.f32.mxu0 0.0
        %713 = vmatmul.mubr.f32.gmra.mrb[0].mxu0 %v270
        %v714 = vpop.f32.mrb[0].mxu0
        %v715 = vadd.f32 0.0, %v714
        %v716 = vpop.f32.mrb[0].mxu0
        %v717 = vadd.f32 0.0, %v716
        %718 = vmatprep.mubr.f32.mxu0 0.0
        %719 = vmatmul.mubr.f32.gmra.mrb[0].mxu0 %v273
        %v720 = vpop.f32.mrb[0].mxu0
        %v721 = vadd.f32 0.0, %v720
        %v722 = vpop.f32.mrb[0].mxu0
        %v723 = vadd.f32 0.0, %v722
        %724 = vmatprep.mubr.f32.mxu0 0.0
        %725 = vmatmul.mubr.f32.gmra.mrb[0].mxu0 %v276
        %v726 = vpop.f32.mrb[0].mxu0
        %v727 = vadd.f32 0.0, %v726
        %v728 = vpop.f32.mrb[0].mxu0
        %v729 = vadd.f32 0.0, %v728
        %730 = vmatprep.mubr.f32.mxu0 0.0
        %731 = vmatmul.mubr.f32.gmra.mrb[0].mxu0 %v279
        %v732 = vpop.f32.mrb[0].mxu0
        %v733 = vadd.f32 0.0, %v732
        %v734 = vpop.f32.mrb[0].mxu0
        %v735 = vadd.f32 0.0, %v734
        %736 = vmatprep.mubr.f32.mxu0 0.0
        %737 = vmatmul.mubr.f32.gmra.mrb[0].mxu0 %v282
        %v738 = vpop.f32.mrb[0].mxu0
        %v739 = vadd.f32 0.0, %v738
        %v740 = vpop.f32.mrb[0].mxu0
        %v741 = vadd.f32 0.0, %v740
        %742 = vmatprep.mubr.f32.mxu0 0.0
        %743 = vmatmul.mubr.f32.gmra.mrb[0].mxu0 %v285
        %v744 = vpop.f32.mrb[0].mxu0
        %v745 = vadd.f32 0.0, %v744
        %v746 = vpop.f32.mrb[0].mxu0
        %v747 = vadd.f32 0.0, %v746
        %748 = vmatprep.mubr.f32.mxu0 0.0
        %749 = vmatmul.mubr.f32.gmra.mrb[0].mxu0 %v288
        %v750 = vpop.f32.mrb[0].mxu0
        %v751 = vadd.f32 0.0, %v750
        %v752 = vpop.f32.mrb[0].mxu0
        %v753 = vadd.f32 0.0, %v752
        %754 = vmatprep.mubr.f32.mxu0 0.0
        %755 = vmatmul.mubr.f32.gmra.mrb[0].mxu0 %v291
        %v756 = vpop.f32.mrb[0].mxu0
        %v757 = vadd.f32 0.0, %v756
        %v758 = vpop.f32.mrb[0].mxu0
        %v759 = vadd.f32 0.0, %v758
        %760 = vmatprep.mubr.f32.mxu0 0.0
        %761 = vmatmul.mubr.f32.gmra.mrb[0].mxu0 %v294
        %v762 = vpop.f32.mrb[0].mxu0
        %v763 = vadd.f32 0.0, %v762
        %v764 = vpop.f32.mrb[0].mxu0
        %v765 = vadd.f32 0.0, %v764
        %766 = vmatprep.mubr.f32.mxu0 0.0
        %767 = vmatmul.mubr.f32.gmra.mrb[0].mxu0 %v297
        %v768 = vpop.f32.mrb[0].mxu0
        %v769 = vadd.f32 0.0, %v768
        %v770 = vpop.f32.mrb[0].mxu0
        %v771 = vadd.f32 0.0, %v770
        %772 = vmatprep.mubr.f32.mxu0 0.0
        %773 = vmatmul.mubr.f32.gmra.mrb[0].mxu0 %v300
        %v774 = vpop.f32.mrb[0].mxu0
        %v775 = vadd.f32 0.0, %v774
        %v776 = vpop.f32.mrb[0].mxu0
        %v777 = vadd.f32 0.0, %v776
        %778 = vmatprep.mubr.f32.mxu0 0.0
        %779 = vmatmul.mubr.f32.gmra.mrb[0].mxu0 %v303
        %v780 = vpop.f32.mrb[0].mxu0
        %v781 = vadd.f32 0.0, %v780
        %v782 = vpop.f32.mrb[0].mxu0
        %v783 = vadd.f32 0.0, %v782
        %784 = vmatprep.mubr.f32.mxu0 0.0
        %785 = vmatmul.mubr.f32.gmra.mrb[0].mxu0 %v306
        %v786 = vpop.f32.mrb[0].mxu0
        %v787 = vadd.f32 0.0, %v786
        %v788 = vpop.f32.mrb[0].mxu0
        %v789 = vadd.f32 0.0, %v788
        %790 = vdwg.mxu0
        %791 = vmatprep.subr.mxu0 %v258
        %792 = vmatpush1.msra.mxu0 %v257
        %793 = vmatprep.subr.mxu0 0.0
        %794 = vmatpush1.msra.mxu0 0.0
        %795 = vmatprep.subr.mxu0 0.0
        %796 = vmatpush1.msra.mxu0 0.0
        %797 = vmatprep.subr.mxu0 0.0
        %798 = vmatpush1.msra.mxu0 0.0
        %799 = vmatprep.subr.mxu0 0.0
        %800 = vmatpush1.msra.mxu0 0.0
        %801 = vmatprep.subr.mxu0 0.0
        %802 = vmatpush1.msra.mxu0 0.0
        %803 = vmatprep.subr.mxu0 0.0
        %804 = vmatpush1.msra.mxu0 0.0
        %805 = vmatprep.subr.mxu0 0.0
        %806 = vmatpush1.msra.mxu0 0.0
        %807 = vmatprep.subr.mxu0 0.0
        %808 = vmatpush1.msra.mxu0 0.0
        %809 = vmatprep.subr.mxu0 0.0
        %810 = vmatpush1.msra.mxu0 0.0
        %811 = vmatprep.subr.mxu0 0.0
        %812 = vmatpush1.msra.mxu0 0.0
        %813 = vmatprep.subr.mxu0 0.0
        %814 = vmatpush1.msra.mxu0 0.0
        %815 = vmatprep.subr.mxu0 0.0
        %816 = vmatpush1.msra.mxu0 0.0
        %817 = vmatprep.subr.mxu0 0.0
        %818 = vmatpush1.msra.mxu0 0.0
        %819 = vmatprep.subr.mxu0 0.0
        %820 = vmatpush1.msra.mxu0 0.0
        %821 = vmatprep.subr.mxu0 0.0
        %822 = vmatpush1.msra.mxu0 0.0
        %823 = vmatprep.subr.mxu0 0.0
        %824 = vmatpush1.msra.mxu0 0.0
        %825 = vmatprep.subr.mxu0 0.0
        %826 = vmatpush1.msra.mxu0 0.0
        %827 = vmatprep.subr.mxu0 0.0
        %828 = vmatpush1.msra.mxu0 0.0
        %829 = vmatprep.subr.mxu0 0.0
        %830 = vmatpush1.msra.mxu0 0.0
        %831 = vmatprep.subr.mxu0 0.0
        %832 = vmatpush1.msra.mxu0 0.0
        %833 = vmatprep.subr.mxu0 0.0
        %834 = vmatpush1.msra.mxu0 0.0
        %835 = vmatprep.subr.mxu0 0.0
        %836 = vmatpush1.msra.mxu0 0.0
        %837 = vmatprep.subr.mxu0 0.0
        %838 = vmatpush1.msra.mxu0 0.0
        %839 = vmatprep.subr.mxu0 0.0
        %840 = vmatpush1.msra.mxu0 0.0
        %841 = vmatprep.subr.mxu0 0.0
        %842 = vmatpush1.msra.mxu0 0.0
        %843 = vmatprep.subr.mxu0 0.0
        %844 = vmatpush1.msra.mxu0 0.0
        %845 = vmatprep.subr.mxu0 0.0
        %846 = vmatpush1.msra.mxu0 0.0
        %847 = vmatprep.subr.mxu0 0.0
        %848 = vmatpush1.msra.mxu0 0.0
        %849 = vmatprep.subr.mxu0 0.0
        %850 = vmatpush1.msra.mxu0 0.0
        %851 = vmatprep.subr.mxu0 0.0
        %852 = vmatpush1.msra.mxu0 0.0
        %853 = vmatprep.subr.mxu0 0.0
        %854 = vmatpush1.msra.mxu0 0.0
        %855 = vmatprep.mubr.f32.mxu0 0.0
        %856 = vmatmul.mubr.f32.gmra.mrb[0].mxu0 %v261
        %v857 = vpop.f32.mrb[0].mxu0
        %v858 = vadd.f32 0.0, %v857
        %v859 = vpop.f32.mrb[0].mxu0
        %v860 = vadd.f32 0.0, %v859
        %861 = vmatprep.mubr.f32.mxu0 0.0
        %862 = vmatmul.mubr.f32.gmra.mrb[0].mxu0 %v264
        %v863 = vpop.f32.mrb[0].mxu0
        %v864 = vadd.f32 0.0, %v863
        %v865 = vpop.f32.mrb[0].mxu0
        %v866 = vadd.f32 0.0, %v865
        %867 = vmatprep.mubr.f32.mxu0 0.0
        %868 = vmatmul.mubr.f32.gmra.mrb[0].mxu0 %v267
        %v869 = vpop.f32.mrb[0].mxu0
        %v870 = vadd.f32 0.0, %v869
        %v871 = vpop.f32.mrb[0].mxu0
        %v872 = vadd.f32 0.0, %v871
        %873 = vmatprep.mubr.f32.mxu0 0.0
        %874 = vmatmul.mubr.f32.gmra.mrb[0].mxu0 %v270
        %v875 = vpop.f32.mrb[0].mxu0
        %v876 = vadd.f32 0.0, %v875
        %v877 = vpop.f32.mrb[0].mxu0
        %v878 = vadd.f32 0.0, %v877
        %879 = vmatprep.mubr.f32.mxu0 0.0
        %880 = vmatmul.mubr.f32.gmra.mrb[0].mxu0 %v273
        %v881 = vpop.f32.mrb[0].mxu0
        %v882 = vadd.f32 0.0, %v881
        %v883 = vpop.f32.mrb[0].mxu0
        %v884 = vadd.f32 0.0, %v883
        %885 = vmatprep.mubr.f32.mxu0 0.0
        %886 = vmatmul.mubr.f32.gmra.mrb[0].mxu0 %v276
        %v887 = vpop.f32.mrb[0].mxu0
        %v888 = vadd.f32 0.0, %v887
        %v889 = vpop.f32.mrb[0].mxu0
        %v890 = vadd.f32 0.0, %v889
        %891 = vmatprep.mubr.f32.mxu0 0.0
        %892 = vmatmul.mubr.f32.gmra.mrb[0].mxu0 %v279
        %v893 = vpop.f32.mrb[0].mxu0
        %v894 = vadd.f32 0.0, %v893
        %v895 = vpop.f32.mrb[0].mxu0
        %v896 = vadd.f32 0.0, %v895
        %897 = vmatprep.mubr.f32.mxu0 0.0
        %898 = vmatmul.mubr.f32.gmra.mrb[0].mxu0 %v282
        %v899 = vpop.f32.mrb[0].mxu0
        %v900 = vadd.f32 0.0, %v899
        %v901 = vpop.f32.mrb[0].mxu0
        %v902 = vadd.f32 0.0, %v901
        %903 = vmatprep.mubr.f32.mxu0 0.0
        %904 = vmatmul.mubr.f32.gmra.mrb[0].mxu0 %v285
        %v905 = vpop.f32.mrb[0].mxu0
        %v906 = vadd.f32 0.0, %v905
        %v907 = vpop.f32.mrb[0].mxu0
        %v908 = vadd.f32 0.0, %v907
        %909 = vmatprep.mubr.f32.mxu0 0.0
        %910 = vmatmul.mubr.f32.gmra.mrb[0].mxu0 %v288
        %v911 = vpop.f32.mrb[0].mxu0
        %v912 = vadd.f32 0.0, %v911
        %v913 = vpop.f32.mrb[0].mxu0
        %v914 = vadd.f32 0.0, %v913
        %915 = vmatprep.mubr.f32.mxu0 0.0
        %916 = vmatmul.mubr.f32.gmra.mrb[0].mxu0 %v291
        %v917 = vpop.f32.mrb[0].mxu0
        %v918 = vadd.f32 0.0, %v917
        %v919 = vpop.f32.mrb[0].mxu0
        %v920 = vadd.f32 0.0, %v919
        %921 = vmatprep.mubr.f32.mxu0 0.0
        %922 = vmatmul.mubr.f32.gmra.mrb[0].mxu0 %v294
        %v923 = vpop.f32.mrb[0].mxu0
        %v924 = vadd.f32 0.0, %v923
        %v925 = vpop.f32.mrb[0].mxu0
        %v926 = vadd.f32 0.0, %v925
        %927 = vmatprep.mubr.f32.mxu0 0.0
        %928 = vmatmul.mubr.f32.gmra.mrb[0].mxu0 %v297
        %v929 = vpop.f32.mrb[0].mxu0
        %v930 = vadd.f32 0.0, %v929
        %v931 = vpop.f32.mrb[0].mxu0
        %v932 = vadd.f32 0.0, %v931
        %933 = vmatprep.mubr.f32.mxu0 0.0
        %934 = vmatmul.mubr.f32.gmra.mrb[0].mxu0 %v300
        %v935 = vpop.f32.mrb[0].mxu0
        %v936 = vadd.f32 0.0, %v935
        %v937 = vpop.f32.mrb[0].mxu0
        %v938 = vadd.f32 0.0, %v937
        %939 = vmatprep.mubr.f32.mxu0 0.0
        %940 = vmatmul.mubr.f32.gmra.mrb[0].mxu0 %v303
        %v941 = vpop.f32.mrb[0].mxu0
        %v942 = vadd.f32 0.0, %v941
        %v943 = vpop.f32.mrb[0].mxu0
        %v944 = vadd.f32 0.0, %v943
        %945 = vmatprep.mubr.f32.mxu0 0.0
        %946 = vmatmul.mubr.f32.gmra.mrb[0].mxu0 %v306
        %v947 = vpop.f32.mrb[0].mxu0
        %v948 = vadd.f32 0.0, %v947
        %v949 = vpop.f32.mrb[0].mxu0
        %v950 = vadd.f32 0.0, %v949
        %951 = vdwg.mxu0
        %v952 = vmax.f32 %v375, 0.0
        %v953 = vmax.f32 %v377, 0.0
        %v954 = vmax.f32 %v536, 0.0
        %v955 = vmax.f32 %v538, 0.0
        %v956 = vmax.f32 %v697, 0.0
        %v957 = vmax.f32 %v699, 0.0
        %v958 = vmax.f32 %v858, 0.0
        %v959 = vmax.f32 %v860, 0.0
        %v960 = vmax.f32 %v381, 0.0
        %v961 = vmax.f32 %v383, 0.0
        %v962 = vmax.f32 %v542, 0.0
        %v963 = vmax.f32 %v544, 0.0
        %v964 = vmax.f32 %v703, 0.0
        %v965 = vmax.f32 %v705, 0.0
        %v966 = vmax.f32 %v864, 0.0
        %v967 = vmax.f32 %v866, 0.0
        %v968 = vmax.f32 %v387, 0.0
        %v969 = vmax.f32 %v389, 0.0
        %v970 = vmax.f32 %v548, 0.0
        %v971 = vmax.f32 %v550, 0.0
        %v972 = vmax.f32 %v709, 0.0
        %v973 = vmax.f32 %v711, 0.0
        %v974 = vmax.f32 %v870, 0.0
        %v975 = vmax.f32 %v872, 0.0
        %v976 = vmax.f32 %v393, 0.0
        %v977 = vmax.f32 %v395, 0.0
        %v978 = vmax.f32 %v554, 0.0
        %v979 = vmax.f32 %v556, 0.0
        %v980 = vmax.f32 %v715, 0.0
        %v981 = vmax.f32 %v717, 0.0
        %v982 = vmax.f32 %v876, 0.0
        %v983 = vmax.f32 %v878, 0.0
        %v984 = vmax.f32 %v399, 0.0
        %v985 = vmax.f32 %v401, 0.0
        %v986 = vmax.f32 %v560, 0.0
        %v987 = vmax.f32 %v562, 0.0
        %v988 = vmax.f32 %v721, 0.0
        %v989 = vmax.f32 %v723, 0.0
        %v990 = vmax.f32 %v882, 0.0
        %v991 = vmax.f32 %v884, 0.0
        %v992 = vmax.f32 %v405, 0.0
        %v993 = vmax.f32 %v407, 0.0
        %v994 = vmax.f32 %v566, 0.0
        %v995 = vmax.f32 %v568, 0.0
        %v996 = vmax.f32 %v727, 0.0
        %v997 = vmax.f32 %v729, 0.0
        %v998 = vmax.f32 %v888, 0.0
        %v999 = vmax.f32 %v890, 0.0
        %v1000 = vmax.f32 %v411, 0.0
        %v1001 = vmax.f32 %v413, 0.0
        %v1002 = vmax.f32 %v572, 0.0
        %v1003 = vmax.f32 %v574, 0.0
        %v1004 = vmax.f32 %v733, 0.0
        %v1005 = vmax.f32 %v735, 0.0
        %v1006 = vmax.f32 %v894, 0.0
        %v1007 = vmax.f32 %v896, 0.0
        %v1008 = vmax.f32 %v417, 0.0
        %v1009 = vmax.f32 %v419, 0.0
        %v1010 = vmax.f32 %v578, 0.0
        %v1011 = vmax.f32 %v580, 0.0
        %v1012 = vmax.f32 %v739, 0.0
        %v1013 = vmax.f32 %v741, 0.0
        %v1014 = vmax.f32 %v900, 0.0
        %v1015 = vmax.f32 %v902, 0.0
        %v1016 = vmax.f32 %v423, 0.0
        %v1017 = vmax.f32 %v425, 0.0
        %v1018 = vmax.f32 %v584, 0.0
        %v1019 = vmax.f32 %v586, 0.0
        %v1020 = vmax.f32 %v745, 0.0
        %v1021 = vmax.f32 %v747, 0.0
        %v1022 = vmax.f32 %v906, 0.0
        %v1023 = vmax.f32 %v908, 0.0
        %v1024 = vmax.f32 %v429, 0.0
        %v1025 = vmax.f32 %v431, 0.0
        %v1026 = vmax.f32 %v590, 0.0
        %v1027 = vmax.f32 %v592, 0.0
        %v1028 = vmax.f32 %v751, 0.0
        %v1029 = vmax.f32 %v753, 0.0
        %v1030 = vmax.f32 %v912, 0.0
        %v1031 = vmax.f32 %v914, 0.0
        %v1032 = vmax.f32 %v435, 0.0
        %v1033 = vmax.f32 %v437, 0.0
        %v1034 = vmax.f32 %v596, 0.0
        %v1035 = vmax.f32 %v598, 0.0
        %v1036 = vmax.f32 %v757, 0.0
        %v1037 = vmax.f32 %v759, 0.0
        %v1038 = vmax.f32 %v918, 0.0
        %v1039 = vmax.f32 %v920, 0.0
        %v1040 = vmax.f32 %v441, 0.0
        %v1041 = vmax.f32 %v443, 0.0
        %v1042 = vmax.f32 %v602, 0.0
        %v1043 = vmax.f32 %v604, 0.0
        %v1044 = vmax.f32 %v763, 0.0
        %v1045 = vmax.f32 %v765, 0.0
        %v1046 = vmax.f32 %v924, 0.0
        %v1047 = vmax.f32 %v926, 0.0
        %v1048 = vmax.f32 %v447, 0.0
        %v1049 = vmax.f32 %v449, 0.0
        %v1050 = vmax.f32 %v608, 0.0
        %v1051 = vmax.f32 %v610, 0.0
        %v1052 = vmax.f32 %v769, 0.0
        %v1053 = vmax.f32 %v771, 0.0
        %v1054 = vmax.f32 %v930, 0.0
        %v1055 = vmax.f32 %v932, 0.0
        %v1056 = vmax.f32 %v453, 0.0
        %v1057 = vmax.f32 %v455, 0.0
        %v1058 = vmax.f32 %v614, 0.0
        %v1059 = vmax.f32 %v616, 0.0
        %v1060 = vmax.f32 %v775, 0.0
        %v1061 = vmax.f32 %v777, 0.0
        %v1062 = vmax.f32 %v936, 0.0
        %v1063 = vmax.f32 %v938, 0.0
        %v1064 = vmax.f32 %v459, 0.0
        %v1065 = vmax.f32 %v461, 0.0
        %v1066 = vmax.f32 %v620, 0.0
        %v1067 = vmax.f32 %v622, 0.0
        %v1068 = vmax.f32 %v781, 0.0
        %v1069 = vmax.f32 %v783, 0.0
        %v1070 = vmax.f32 %v942, 0.0
        %v1071 = vmax.f32 %v944, 0.0
        %v1072 = vmax.f32 %v465, 0.0
        %v1073 = vmax.f32 %v467, 0.0
        %v1074 = vmax.f32 %v626, 0.0
        %v1075 = vmax.f32 %v628, 0.0
        %v1076 = vmax.f32 %v787, 0.0
        %v1077 = vmax.f32 %v789, 0.0
        %v1078 = vmax.f32 %v948, 0.0
        %v1079 = vmax.f32 %v950, 0.0
        %v1080 = vmin.f32 %v952, 1.0
        %v1081 = vmin.f32 %v953, 1.0
        %v1082 = vmin.f32 %v954, 1.0
        %v1083 = vmin.f32 %v955, 1.0
        %v1084 = vmin.f32 %v956, 1.0
        %v1085 = vmin.f32 %v957, 1.0
        %v1086 = vmin.f32 %v958, 1.0
        %v1087 = vmin.f32 %v959, 1.0
        %v1088 = vmin.f32 %v960, 1.0
        %v1089 = vmin.f32 %v961, 1.0
        %v1090 = vmin.f32 %v962, 1.0
        %v1091 = vmin.f32 %v963, 1.0
        %v1092 = vmin.f32 %v964, 1.0
        %v1093 = vmin.f32 %v965, 1.0
        %v1094 = vmin.f32 %v966, 1.0
        %v1095 = vmin.f32 %v967, 1.0
        %v1096 = vmin.f32 %v968, 1.0
        %v1097 = vmin.f32 %v969, 1.0
        %v1098 = vmin.f32 %v970, 1.0
        %v1099 = vmin.f32 %v971, 1.0
        %v1100 = vmin.f32 %v972, 1.0
        %v1101 = vmin.f32 %v973, 1.0
        %v1102 = vmin.f32 %v974, 1.0
        %v1103 = vmin.f32 %v975, 1.0
        %v1104 = vmin.f32 %v976, 1.0
        %v1105 = vmin.f32 %v977, 1.0
        %v1106 = vmin.f32 %v978, 1.0
        %v1107 = vmin.f32 %v979, 1.0
        %v1108 = vmin.f32 %v980, 1.0
        %v1109 = vmin.f32 %v981, 1.0
        %v1110 = vmin.f32 %v982, 1.0
        %v1111 = vmin.f32 %v983, 1.0
        %v1112 = vmin.f32 %v984, 1.0
        %v1113 = vmin.f32 %v985, 1.0
        %v1114 = vmin.f32 %v986, 1.0
        %v1115 = vmin.f32 %v987, 1.0
        %v1116 = vmin.f32 %v988, 1.0
        %v1117 = vmin.f32 %v989, 1.0
        %v1118 = vmin.f32 %v990, 1.0
        %v1119 = vmin.f32 %v991, 1.0
        %v1120 = vmin.f32 %v992, 1.0
        %v1121 = vmin.f32 %v993, 1.0
        %v1122 = vmin.f32 %v994, 1.0
        %v1123 = vmin.f32 %v995, 1.0
        %v1124 = vmin.f32 %v996, 1.0
        %v1125 = vmin.f32 %v997, 1.0
        %v1126 = vmin.f32 %v998, 1.0
        %v1127 = vmin.f32 %v999, 1.0
        %v1128 = vmin.f32 %v1000, 1.0
        %v1129 = vmin.f32 %v1001, 1.0
        %v1130 = vmin.f32 %v1002, 1.0
        %v1131 = vmin.f32 %v1003, 1.0
        %v1132 = vmin.f32 %v1004, 1.0
        %v1133 = vmin.f32 %v1005, 1.0
        %v1134 = vmin.f32 %v1006, 1.0
        %v1135 = vmin.f32 %v1007, 1.0
        %v1136 = vmin.f32 %v1008, 1.0
        %v1137 = vmin.f32 %v1009, 1.0
        %v1138 = vmin.f32 %v1010, 1.0
        %v1139 = vmin.f32 %v1011, 1.0
        %v1140 = vmin.f32 %v1012, 1.0
        %v1141 = vmin.f32 %v1013, 1.0
        %v1142 = vmin.f32 %v1014, 1.0
        %v1143 = vmin.f32 %v1015, 1.0
        %v1144 = vmin.f32 %v1016, 1.0
        %v1145 = vmin.f32 %v1017, 1.0
        %v1146 = vmin.f32 %v1018, 1.0
        %v1147 = vmin.f32 %v1019, 1.0
        %v1148 = vmin.f32 %v1020, 1.0
        %v1149 = vmin.f32 %v1021, 1.0
        %v1150 = vmin.f32 %v1022, 1.0
        %v1151 = vmin.f32 %v1023, 1.0
        %v1152 = vmin.f32 %v1024, 1.0
        %v1153 = vmin.f32 %v1025, 1.0
        %v1154 = vmin.f32 %v1026, 1.0
        %v1155 = vmin.f32 %v1027, 1.0
        %v1156 = vmin.f32 %v1028, 1.0
        %v1157 = vmin.f32 %v1029, 1.0
        %v1158 = vmin.f32 %v1030, 1.0
        %v1159 = vmin.f32 %v1031, 1.0
        %v1160 = vmin.f32 %v1032, 1.0
        %v1161 = vmin.f32 %v1033, 1.0
        %v1162 = vmin.f32 %v1034, 1.0
        %v1163 = vmin.f32 %v1035, 1.0
        %v1164 = vmin.f32 %v1036, 1.0
        %v1165 = vmin.f32 %v1037, 1.0
        %v1166 = vmin.f32 %v1038, 1.0
        %v1167 = vmin.f32 %v1039, 1.0
        %v1168 = vmin.f32 %v1040, 1.0
        %v1169 = vmin.f32 %v1041, 1.0
        %v1170 = vmin.f32 %v1042, 1.0
        %v1171 = vmin.f32 %v1043, 1.0
        %v1172 = vmin.f32 %v1044, 1.0
        %v1173 = vmin.f32 %v1045, 1.0
        %v1174 = vmin.f32 %v1046, 1.0
        %v1175 = vmin.f32 %v1047, 1.0
        %v1176 = vmin.f32 %v1048, 1.0
        %v1177 = vmin.f32 %v1049, 1.0
        %v1178 = vmin.f32 %v1050, 1.0
        %v1179 = vmin.f32 %v1051, 1.0
        %v1180 = vmin.f32 %v1052, 1.0
        %v1181 = vmin.f32 %v1053, 1.0
        %v1182 = vmin.f32 %v1054, 1.0
        %v1183 = vmin.f32 %v1055, 1.0
        %v1184 = vmin.f32 %v1056, 1.0
        %v1185 = vmin.f32 %v1057, 1.0
        %v1186 = vmin.f32 %v1058, 1.0
        %v1187 = vmin.f32 %v1059, 1.0
        %v1188 = vmin.f32 %v1060, 1.0
        %v1189 = vmin.f32 %v1061, 1.0
        %v1190 = vmin.f32 %v1062, 1.0
        %v1191 = vmin.f32 %v1063, 1.0
        %v1192 = vmin.f32 %v1064, 1.0
        %v1193 = vmin.f32 %v1065, 1.0
        %v1194 = vmin.f32 %v1066, 1.0
        %v1195 = vmin.f32 %v1067, 1.0
        %v1196 = vmin.f32 %v1068, 1.0
        %v1197 = vmin.f32 %v1069, 1.0
        %v1198 = vmin.f32 %v1070, 1.0
        %v1199 = vmin.f32 %v1071, 1.0
        %v1200 = vmin.f32 %v1072, 1.0
        %v1201 = vmin.f32 %v1073, 1.0
        %v1202 = vmin.f32 %v1074, 1.0
        %v1203 = vmin.f32 %v1075, 1.0
        %v1204 = vmin.f32 %v1076, 1.0
        %v1205 = vmin.f32 %v1077, 1.0
        %v1206 = vmin.f32 %v1078, 1.0
        %v1207 = vmin.f32 %v1079, 1.0
        %v1208 = vld [vmem:[#allocation2] sm:$0xff]
        %v1209 = vld [vmem:[#allocation2 + $0x8] sm:$0xff]
        %v1210 = vld [vmem:[#allocation2 + $0x10] sm:$0xff]
        %v1211 = vld [vmem:[#allocation2 + $0x18] sm:$0xff]
        %v1212 = vld [vmem:[#allocation2 + $0x20] sm:$0xff]
        %v1213 = vld [vmem:[#allocation2 + $0x28] sm:$0xff]
        %v1214 = vld [vmem:[#allocation2 + $0x30] sm:$0xff]
        %v1215 = vld [vmem:[#allocation2 + $0x38] sm:$0xff]
        %v1216 = vld [vmem:[%s215] sm:$0xff]
        %1217 = vmatprep.subr.mxu0 %v1081
        %1218 = vmatpush1.msra.mxu0 %v1080
        %1219 = vmatprep.subr.mxu0 %v1089
        %1220 = vmatpush1.msra.mxu0 %v1088
        %1221 = vmatprep.subr.mxu0 %v1097
        %1222 = vmatpush1.msra.mxu0 %v1096
        %1223 = vmatprep.subr.mxu0 %v1105
        %1224 = vmatpush1.msra.mxu0 %v1104
        %1225 = vmatprep.subr.mxu0 %v1113
        %1226 = vmatpush1.msra.mxu0 %v1112
        %1227 = vmatprep.subr.mxu0 %v1121
        %1228 = vmatpush1.msra.mxu0 %v1120
        %1229 = vmatprep.subr.mxu0 %v1129
        %1230 = vmatpush1.msra.mxu0 %v1128
        %1231 = vmatprep.subr.mxu0 %v1137
        %1232 = vmatpush1.msra.mxu0 %v1136
        %1233 = vmatprep.subr.mxu0 %v1145
        %1234 = vmatpush1.msra.mxu0 %v1144
        %1235 = vmatprep.subr.mxu0 %v1153
        %1236 = vmatpush1.msra.mxu0 %v1152
        %1237 = vmatprep.subr.mxu0 %v1161
        %1238 = vmatpush1.msra.mxu0 %v1160
        %1239 = vmatprep.subr.mxu0 %v1169
        %1240 = vmatpush1.msra.mxu0 %v1168
        %1241 = vmatprep.subr.mxu0 %v1177
        %1242 = vmatpush1.msra.mxu0 %v1176
        %1243 = vmatprep.subr.mxu0 %v1185
        %1244 = vmatpush1.msra.mxu0 %v1184
        %1245 = vmatprep.subr.mxu0 %v1193
        %1246 = vmatpush1.msra.mxu0 %v1192
        %1247 = vmatprep.subr.mxu0 %v1201
        %1248 = vmatpush1.msra.mxu0 %v1200
        %1249 = vmatprep.subr.mxu0 0.0
        %1250 = vmatpush1.msra.mxu0 0.0
        %1251 = vmatprep.subr.mxu0 0.0
        %1252 = vmatpush1.msra.mxu0 0.0
        %1253 = vmatprep.subr.mxu0 0.0
        %1254 = vmatpush1.msra.mxu0 0.0
        %1255 = vmatprep.subr.mxu0 0.0
        %1256 = vmatpush1.msra.mxu0 0.0
        %1257 = vmatprep.subr.mxu0 0.0
        %1258 = vmatpush1.msra.mxu0 0.0
        %1259 = vmatprep.subr.mxu0 0.0
        %1260 = vmatpush1.msra.mxu0 0.0
        %1261 = vmatprep.subr.mxu0 0.0
        %1262 = vmatpush1.msra.mxu0 0.0
        %1263 = vmatprep.subr.mxu0 0.0
        %1264 = vmatpush1.msra.mxu0 0.0
        %1265 = vmatprep.subr.mxu0 0.0
        %1266 = vmatpush1.msra.mxu0 0.0
        %1267 = vmatprep.subr.mxu0 0.0
        %1268 = vmatpush1.msra.mxu0 0.0
        %1269 = vmatprep.subr.mxu0 0.0
        %1270 = vmatpush1.msra.mxu0 0.0
        %1271 = vmatprep.subr.mxu0 0.0
        %1272 = vmatpush1.msra.mxu0 0.0
        %1273 = vmatprep.subr.mxu0 0.0
        %1274 = vmatpush1.msra.mxu0 0.0
        %1275 = vmatprep.subr.mxu0 0.0
        %1276 = vmatpush1.msra.mxu0 0.0
        %1277 = vmatprep.subr.mxu0 0.0
        %1278 = vmatpush1.msra.mxu0 0.0
        %1279 = vmatprep.subr.mxu0 0.0
        %1280 = vmatpush1.msra.mxu0 0.0
        %1281 = vmatprep.mubr.f32.mxu0 0.0
        %1282 = vmatmul.mubr.f32.gmra.mrb[0].mxu0 %v1216
        %v1283 = vpop.f32.mrb[0].mxu0
        %v1284 = vadd.f32 0.0, %v1283
        %v1285 = vpop.f32.mrb[0].mxu0
        %v1286 = vadd.f32 0.0, %v1285
        %1287 = vdwg.mxu0
        %1288 = vmatprep.subr.mxu0 %v1083
        %1289 = vmatpush1.msra.mxu0 %v1082
        %1290 = vmatprep.subr.mxu0 %v1091
        %1291 = vmatpush1.msra.mxu0 %v1090
        %1292 = vmatprep.subr.mxu0 %v1099
        %1293 = vmatpush1.msra.mxu0 %v1098
        %1294 = vmatprep.subr.mxu0 %v1107
        %1295 = vmatpush1.msra.mxu0 %v1106
        %1296 = vmatprep.subr.mxu0 %v1115
        %1297 = vmatpush1.msra.mxu0 %v1114
        %1298 = vmatprep.subr.mxu0 %v1123
        %1299 = vmatpush1.msra.mxu0 %v1122
        %1300 = vmatprep.subr.mxu0 %v1131
        %1301 = vmatpush1.msra.mxu0 %v1130
        %1302 = vmatprep.subr.mxu0 %v1139
        %1303 = vmatpush1.msra.mxu0 %v1138
        %1304 = vmatprep.subr.mxu0 %v1147
        %1305 = vmatpush1.msra.mxu0 %v1146
        %1306 = vmatprep.subr.mxu0 %v1155
        %1307 = vmatpush1.msra.mxu0 %v1154
        %1308 = vmatprep.subr.mxu0 %v1163
        %1309 = vmatpush1.msra.mxu0 %v1162
        %1310 = vmatprep.subr.mxu0 %v1171
        %1311 = vmatpush1.msra.mxu0 %v1170
        %1312 = vmatprep.subr.mxu0 %v1179
        %1313 = vmatpush1.msra.mxu0 %v1178
        %1314 = vmatprep.subr.mxu0 %v1187
        %1315 = vmatpush1.msra.mxu0 %v1186
        %1316 = vmatprep.subr.mxu0 %v1195
        %1317 = vmatpush1.msra.mxu0 %v1194
        %1318 = vmatprep.subr.mxu0 %v1203
        %1319 = vmatpush1.msra.mxu0 %v1202
        %1320 = vmatprep.subr.mxu0 0.0
        %1321 = vmatpush1.msra.mxu0 0.0
        %1322 = vmatprep.subr.mxu0 0.0
        %1323 = vmatpush1.msra.mxu0 0.0
        %1324 = vmatprep.subr.mxu0 0.0
        %1325 = vmatpush1.msra.mxu0 0.0
        %1326 = vmatprep.subr.mxu0 0.0
        %1327 = vmatpush1.msra.mxu0 0.0
        %1328 = vmatprep.subr.mxu0 0.0
        %1329 = vmatpush1.msra.mxu0 0.0
        %1330 = vmatprep.subr.mxu0 0.0
        %1331 = vmatpush1.msra.mxu0 0.0
        %1332 = vmatprep.subr.mxu0 0.0
        %1333 = vmatpush1.msra.mxu0 0.0
        %1334 = vmatprep.subr.mxu0 0.0
        %1335 = vmatpush1.msra.mxu0 0.0
        %1336 = vmatprep.subr.mxu0 0.0
        %1337 = vmatpush1.msra.mxu0 0.0
        %1338 = vmatprep.subr.mxu0 0.0
        %1339 = vmatpush1.msra.mxu0 0.0
        %1340 = vmatprep.subr.mxu0 0.0
        %1341 = vmatpush1.msra.mxu0 0.0
        %1342 = vmatprep.subr.mxu0 0.0
        %1343 = vmatpush1.msra.mxu0 0.0
        %1344 = vmatprep.subr.mxu0 0.0
        %1345 = vmatpush1.msra.mxu0 0.0
        %1346 = vmatprep.subr.mxu0 0.0
        %1347 = vmatpush1.msra.mxu0 0.0
        %1348 = vmatprep.subr.mxu0 0.0
        %1349 = vmatpush1.msra.mxu0 0.0
        %1350 = vmatprep.subr.mxu0 0.0
        %1351 = vmatpush1.msra.mxu0 0.0
        %1352 = vmatprep.mubr.f32.mxu0 0.0
        %1353 = vmatmul.mubr.f32.gmra.mrb[0].mxu0 %v1216
        %v1354 = vpop.f32.mrb[0].mxu0
        %v1355 = vadd.f32 0.0, %v1354
        %v1356 = vpop.f32.mrb[0].mxu0
        %v1357 = vadd.f32 0.0, %v1356
        %1358 = vdwg.mxu0
        %1359 = vmatprep.subr.mxu0 %v1085
        %1360 = vmatpush1.msra.mxu0 %v1084
        %1361 = vmatprep.subr.mxu0 %v1093
        %1362 = vmatpush1.msra.mxu0 %v1092
        %1363 = vmatprep.subr.mxu0 %v1101
        %1364 = vmatpush1.msra.mxu0 %v1100
        %1365 = vmatprep.subr.mxu0 %v1109
        %1366 = vmatpush1.msra.mxu0 %v1108
        %1367 = vmatprep.subr.mxu0 %v1117
        %1368 = vmatpush1.msra.mxu0 %v1116
        %1369 = vmatprep.subr.mxu0 %v1125
        %1370 = vmatpush1.msra.mxu0 %v1124
        %1371 = vmatprep.subr.mxu0 %v1133
        %1372 = vmatpush1.msra.mxu0 %v1132
        %1373 = vmatprep.subr.mxu0 %v1141
        %1374 = vmatpush1.msra.mxu0 %v1140
        %1375 = vmatprep.subr.mxu0 %v1149
        %1376 = vmatpush1.msra.mxu0 %v1148
        %1377 = vmatprep.subr.mxu0 %v1157
        %1378 = vmatpush1.msra.mxu0 %v1156
        %1379 = vmatprep.subr.mxu0 %v1165
        %1380 = vmatpush1.msra.mxu0 %v1164
        %1381 = vmatprep.subr.mxu0 %v1173
        %1382 = vmatpush1.msra.mxu0 %v1172
        %1383 = vmatprep.subr.mxu0 %v1181
        %1384 = vmatpush1.msra.mxu0 %v1180
        %1385 = vmatprep.subr.mxu0 %v1189
        %1386 = vmatpush1.msra.mxu0 %v1188
        %1387 = vmatprep.subr.mxu0 %v1197
        %1388 = vmatpush1.msra.mxu0 %v1196
        %1389 = vmatprep.subr.mxu0 %v1205
        %1390 = vmatpush1.msra.mxu0 %v1204
        %1391 = vmatprep.subr.mxu0 0.0
        %1392 = vmatpush1.msra.mxu0 0.0
        %1393 = vmatprep.subr.mxu0 0.0
        %1394 = vmatpush1.msra.mxu0 0.0
        %1395 = vmatprep.subr.mxu0 0.0
        %1396 = vmatpush1.msra.mxu0 0.0
        %1397 = vmatprep.subr.mxu0 0.0
        %1398 = vmatpush1.msra.mxu0 0.0
        %1399 = vmatprep.subr.mxu0 0.0
        %1400 = vmatpush1.msra.mxu0 0.0
        %1401 = vmatprep.subr.mxu0 0.0
        %1402 = vmatpush1.msra.mxu0 0.0
        %1403 = vmatprep.subr.mxu0 0.0
        %1404 = vmatpush1.msra.mxu0 0.0
        %1405 = vmatprep.subr.mxu0 0.0
        %1406 = vmatpush1.msra.mxu0 0.0
        %1407 = vmatprep.subr.mxu0 0.0
        %1408 = vmatpush1.msra.mxu0 0.0
        %1409 = vmatprep.subr.mxu0 0.0
        %1410 = vmatpush1.msra.mxu0 0.0
        %1411 = vmatprep.subr.mxu0 0.0
        %1412 = vmatpush1.msra.mxu0 0.0
        %1413 = vmatprep.subr.mxu0 0.0
        %1414 = vmatpush1.msra.mxu0 0.0
        %1415 = vmatprep.subr.mxu0 0.0
        %1416 = vmatpush1.msra.mxu0 0.0
        %1417 = vmatprep.subr.mxu0 0.0
        %1418 = vmatpush1.msra.mxu0 0.0
        %1419 = vmatprep.subr.mxu0 0.0
        %1420 = vmatpush1.msra.mxu0 0.0
        %1421 = vmatprep.subr.mxu0 0.0
        %1422 = vmatpush1.msra.mxu0 0.0
        %1423 = vmatprep.mubr.f32.mxu0 0.0
        %1424 = vmatmul.mubr.f32.gmra.mrb[0].mxu0 %v1216
        %v1425 = vpop.f32.mrb[0].mxu0
        %v1426 = vadd.f32 0.0, %v1425
        %v1427 = vpop.f32.mrb[0].mxu0
        %v1428 = vadd.f32 0.0, %v1427
        %1429 = vdwg.mxu0
        %1430 = vmatprep.subr.mxu0 %v1087
        %1431 = vmatpush1.msra.mxu0 %v1086
        %1432 = vmatprep.subr.mxu0 %v1095
        %1433 = vmatpush1.msra.mxu0 %v1094
        %1434 = vmatprep.subr.mxu0 %v1103
        %1435 = vmatpush1.msra.mxu0 %v1102
        %1436 = vmatprep.subr.mxu0 %v1111
        %1437 = vmatpush1.msra.mxu0 %v1110
        %1438 = vmatprep.subr.mxu0 %v1119
        %1439 = vmatpush1.msra.mxu0 %v1118
        %1440 = vmatprep.subr.mxu0 %v1127
        %1441 = vmatpush1.msra.mxu0 %v1126
        %1442 = vmatprep.subr.mxu0 %v1135
        %1443 = vmatpush1.msra.mxu0 %v1134
        %1444 = vmatprep.subr.mxu0 %v1143
        %1445 = vmatpush1.msra.mxu0 %v1142
        %1446 = vmatprep.subr.mxu0 %v1151
        %1447 = vmatpush1.msra.mxu0 %v1150
        %1448 = vmatprep.subr.mxu0 %v1159
        %1449 = vmatpush1.msra.mxu0 %v1158
        %1450 = vmatprep.subr.mxu0 %v1167
        %1451 = vmatpush1.msra.mxu0 %v1166
        %1452 = vmatprep.subr.mxu0 %v1175
        %1453 = vmatpush1.msra.mxu0 %v1174
        %1454 = vmatprep.subr.mxu0 %v1183
        %1455 = vmatpush1.msra.mxu0 %v1182
        %1456 = vmatprep.subr.mxu0 %v1191
        %1457 = vmatpush1.msra.mxu0 %v1190
        %1458 = vmatprep.subr.mxu0 %v1199
        %1459 = vmatpush1.msra.mxu0 %v1198
        %1460 = vmatprep.subr.mxu0 %v1207
        %1461 = vmatpush1.msra.mxu0 %v1206
        %1462 = vmatprep.subr.mxu0 0.0
        %1463 = vmatpush1.msra.mxu0 0.0
        %1464 = vmatprep.subr.mxu0 0.0
        %1465 = vmatpush1.msra.mxu0 0.0
        %1466 = vmatprep.subr.mxu0 0.0
        %1467 = vmatpush1.msra.mxu0 0.0
        %1468 = vmatprep.subr.mxu0 0.0
        %1469 = vmatpush1.msra.mxu0 0.0
        %1470 = vmatprep.subr.mxu0 0.0
        %1471 = vmatpush1.msra.mxu0 0.0
        %1472 = vmatprep.subr.mxu0 0.0
        %1473 = vmatpush1.msra.mxu0 0.0
        %1474 = vmatprep.subr.mxu0 0.0
        %1475 = vmatpush1.msra.mxu0 0.0
        %1476 = vmatprep.subr.mxu0 0.0
        %1477 = vmatpush1.msra.mxu0 0.0
        %1478 = vmatprep.subr.mxu0 0.0
        %1479 = vmatpush1.msra.mxu0 0.0
        %1480 = vmatprep.subr.mxu0 0.0
        %1481 = vmatpush1.msra.mxu0 0.0
        %1482 = vmatprep.subr.mxu0 0.0
        %1483 = vmatpush1.msra.mxu0 0.0
        %1484 = vmatprep.subr.mxu0 0.0
        %1485 = vmatpush1.msra.mxu0 0.0
        %1486 = vmatprep.subr.mxu0 0.0
        %1487 = vmatpush1.msra.mxu0 0.0
        %1488 = vmatprep.subr.mxu0 0.0
        %1489 = vmatpush1.msra.mxu0 0.0
        %1490 = vmatprep.subr.mxu0 0.0
        %1491 = vmatpush1.msra.mxu0 0.0
        %1492 = vmatprep.subr.mxu0 0.0
        %1493 = vmatpush1.msra.mxu0 0.0
        %1494 = vmatprep.mubr.f32.mxu0 0.0
        %1495 = vmatmul.mubr.f32.gmra.mrb[0].mxu0 %v1216
        %v1496 = vpop.f32.mrb[0].mxu0
        %v1497 = vadd.f32 0.0, %v1496
        %v1498 = vpop.f32.mrb[0].mxu0
        %v1499 = vadd.f32 0.0, %v1498
        %1500 = vdwg.mxu0
        %v1501 = vadd.f32 %v1208, %v1284
        %v1502 = vadd.f32 %v1209, %v1286
        %v1503 = vadd.f32 %v1210, %v1355
        %v1504 = vadd.f32 %v1211, %v1357
        %v1505 = vadd.f32 %v1212, %v1426
        %v1506 = vadd.f32 %v1213, %v1428
        %v1507 = vadd.f32 %v1214, %v1497
        %v1508 = vadd.f32 %v1215, %v1499
        %1509 = vst [vmem:[#allocation2] sm:$0xff] %v1501
        %1510 = vst [vmem:[#allocation2 + $0x8] sm:$0xff] %v1502
        %1511 = vst [vmem:[#allocation2 + $0x10] sm:$0xff] %v1503
        %1512 = vst [vmem:[#allocation2 + $0x18] sm:$0xff] %v1504
        %1513 = vst [vmem:[#allocation2 + $0x20] sm:$0xff] %v1505
        %1514 = vst [vmem:[#allocation2 + $0x28] sm:$0xff] %v1506
        %1515 = vst [vmem:[#allocation2 + $0x30] sm:$0xff] %v1507
        %1516 = vst [vmem:[#allocation2 + $0x38] sm:$0xff] %v1508
        %p1517 = scmp.eq.s32.totalorder %s22, 1
        // Predicated region
        $region37: #{tpu_custom_call.1} parent=31 // pred_check
          %p1518 = pneg %p1517
        $region38: #{tpu_custom_call.1} parent=31 // pred_check_branch
          %1520 = sbr.rel (%p1518) target = $region40
        $region39: #{tpu_custom_call.1} parent=31 // pred_region
          %s1521 = scalar_lea.vmem [#allocation2], 3
          %v1522 = vld [vmem:[%s1521] ss:$8 sm:$0xf]
          %v1523 = vld [vmem:[%s1521] ss:$8 sm:$0xf0]
          %v1524 = vor.u32 %v1522, %v1523
          %v1525 = vadd.f32 %v1524, 1.0
          %v1526 = vrcp.pop %v1525
          %v1527 = vld [vmem:[#allocation2] sm:$0x7]
          %v1528 = vld [vmem:[#allocation2 + $0x8] sm:$0x7]
          %v1529 = vld [vmem:[#allocation2 + $0x10] sm:$0x7]
          %v1530 = vld [vmem:[#allocation2 + $0x18] sm:$0x7]
          %v1531 = vld [vmem:[#allocation2 + $0x20] sm:$0x7]
          %v1532 = vld [vmem:[#allocation2 + $0x28] sm:$0x7]
          %v1533 = vld [vmem:[#allocation2 + $0x30] sm:$0x7]
          %v1534 = vld [vmem:[#allocation2 + $0x38] sm:$0x7]
          %v1536 = vlaneseq
          %v1537 = vshrl.u32 %v1536, 7
          %v1538 = vsub.s32 0, %v1537
          %v1539 = vrot.slane %v1526, %v1538
          %v1540 = vlaneseq
          %v1541 = vshrl.u32 %v1540, 7
          %v1542 = vsub.s32 1, %v1541
          %v1543 = vrot.slane %v1526, %v1542
          %v1544 = vlaneseq
          %v1545 = vshrl.u32 %v1544, 7
          %v1546 = vsub.s32 2, %v1545
          %v1547 = vrot.slane %v1526, %v1546
          %v1548 = vlaneseq
          %v1549 = vshrl.u32 %v1548, 7
          %v1550 = vsub.s32 3, %v1549
          %v1551 = vrot.slane %v1526, %v1550
          %v1552 = vlaneseq
          %v1553 = vshrl.u32 %v1552, 7
          %v1554 = vsub.s32 4, %v1553
          %v1555 = vrot.slane %v1526, %v1554
          %v1556 = vlaneseq
          %v1557 = vshrl.u32 %v1556, 7
          %v1558 = vsub.s32 5, %v1557
          %v1559 = vrot.slane %v1526, %v1558
          %v1560 = vlaneseq
          %v1561 = vshrl.u32 %v1560, 7
          %v1562 = vsub.s32 6, %v1561
          %v1563 = vrot.slane %v1526, %v1562
          %v1564 = vlaneseq
          %v1565 = vshrl.u32 %v1564, 7
          %v1566 = vsub.s32 7, %v1565
          %v1567 = vrot.slane %v1526, %v1566
          %v1576 = vmul.f32 %v1527, %v1539
          %v1577 = vmul.f32 %v1528, %v1543
          %v1578 = vmul.f32 %v1529, %v1547
          %v1579 = vmul.f32 %v1530, %v1551
          %v1580 = vmul.f32 %v1531, %v1555
          %v1581 = vmul.f32 %v1532, %v1559
          %v1582 = vmul.f32 %v1533, %v1563
          %v1583 = vmul.f32 %v1534, %v1567
          %1584 = vst [vmem:[%s205] sm:$0x7] %v1576
          %1585 = vst [vmem:[%s205 + $0x8] sm:$0x7] %v1577
          %1586 = vst [vmem:[%s205 + $0x10] sm:$0x7] %v1578
          %1587 = vst [vmem:[%s205 + $0x18] sm:$0x7] %v1579
          %1588 = vst [vmem:[%s205 + $0x20] sm:$0x7] %v1580
          %1589 = vst [vmem:[%s205 + $0x28] sm:$0x7] %v1581
          %1590 = vst [vmem:[%s205 + $0x30] sm:$0x7] %v1582
          %1591 = vst [vmem:[%s205 + $0x38] sm:$0x7] %v1583
          %s1592 = scalar_lea.vmem %s205, 3 [#allocation3]
          %1593 = vst [vmem:[%s1592] ss:$8 sm:$0xf] %v1524
          %1594 = vst [vmem:[%s1592] ss:$8 sm:$0xf0] %v1524
          %s1595 = scalar_lea.vmem [#allocation2], 4
          %v1596 = vld [vmem:[%s1595] ss:$8 sm:$0xf]
          %v1597 = vld [vmem:[%s1595] ss:$8 sm:$0xf0]
          %v1598 = vor.u32 %v1596, %v1597
          %v1599 = vadd.f32 %v1598, 1.0
          %v1600 = vmul.f32 %v1599, %v1526
          %v1601 = vmul.f32 %v1600, 45.0
          %s1602 = scalar_lea.vmem %s205, 4 [#allocation3]
          %1603 = vst [vmem:[%s1602] ss:$8 sm:$0xf] %v1601
          %1604 = vst [vmem:[%s1602] ss:$8 sm:$0xf0] %v1601
        $region40: #{tpu_custom_call.1} parent=31 // pred_fallthru
          _
        %s1605 = sand.u32 %s115, 1
        %s1606 = scalar_lea.sflag [#allocation4], %s1605
        %s1607 = sand.u32 %s115, 1
        %s1608 = smul.addr %s1607, 64
        %s1609 = scalar_lea.vmem [#allocation3], %s1608
        // Predicated region
        $region41: #{tpu_custom_call.1} parent=31 // pred_check
          %p1610 = pneg %p125
        $region42: #{tpu_custom_call.1} parent=31 // pred_check_branch
          %1612 = sbr.rel (%p1610) target = $region44
        $region43: #{tpu_custom_call.1} parent=31 // pred_region
          %s1613 = smul.u32 8, %s21
          %s1615 = ssub.s32 1024, 1024
          %1616 = vsyncadd %s1606, %s1615
          %s1617 = smul.addr %s1613, 128
          %s1618 = scalar_lea.hbm %s3, %s1617
          %s1620 = sshll.u32 %s1609, 4
          %s1621 = int_to_ptr.vmem [resolvable:$true] %s1620
          %1623 = dma.vmem_to_hbm [thread:$0]  %s1621, 1024, %s1618, %s1606
        $region44: #{tpu_custom_call.1} parent=31 // pred_fallthru
          _
      $region32: #{tpu_custom_call.1} parent=5 // pred_fallthru
        _
      %p1624 = scmp.le.s32.totalorder 2, %s12
      // Predicated region
      $region45: #{tpu_custom_call.1} parent=5 // pred_check
        %p1625 = pneg %p1624
      $region46: #{tpu_custom_call.1} parent=5 // pred_check_branch
        %1627 = sbr.rel (%p1625) target = $region48
      $region47: #{tpu_custom_call.1} parent=5 // pred_region
        %s1628 = ssub.s32 %s12, 2
        // Predicated region
        $region49: #{tpu_custom_call.1} parent=47 // pred_check
          %p1629 = pneg %p131
        $region50: #{tpu_custom_call.1} parent=47 // pred_check_branch
          %1631 = sbr.rel (%p1629) target = $region52
        $region51: #{tpu_custom_call.1} parent=47 // pred_region
          %s1632 = sand.u32 %s116, 1
          %s1633 = scalar_lea.sflag [#allocation4], %s1632
          %s1634 = sand.u32 %s116, 1
          %s1635 = smul.addr %s1634, 64
          %s1636 = scalar_lea.vmem [#allocation3], %s1635
          %1637 = dma.done %s1633, 1024
        $region52: #{tpu_custom_call.1} parent=47 // pred_fallthru
          _
      $region48: #{tpu_custom_call.1} parent=5 // pred_fallthru
        _
    $region6: #{tpu_custom_call.1} parent=1 // loop_footer
      %s16 = sadd.s32 1, %s12
    $region7: #{tpu_custom_call.1} parent=1 // loop_footer_branch
      %11 = sbr.rel target = $region3
    $region8: #{tpu_custom_call.1} parent=1 // loop_exit
      _
    %1638 = vsyncpa [#allocation4], 1
    %s1639 = scalar_lea.sflag [#allocation4], 1
    %1640 = vsyncpa %s1639, 1

</llo_original>
